<compile_context>
chip_gen: v7x
topology: tpu7x:2x2x1
jax: 0.10.0
libtpu: 0.0.40
codegen_flags: <defaults>
</compile_context>

<pallas_src>
import functools

import jax
import jax.numpy as jnp
from jax.experimental import pallas as pl
from jax.experimental.pallas import tpu as pltpu

D_IN = 768          # BEATs feature dim (fixed by the module)
D_HID = D_IN // 2   # 384
D_OUT = 2           # deepfake / real
D_OUT_PAD = 128     # pad output lane dim to 128 for lane-dense stores


def classifier_kernel(feat_ref, w1_ref, b1_ref, w2_ref, b2_ref, out_ref,
                      acc_ref, *, inv_t, tile_t, t_total):
    t = pl.program_id(1)

    @pl.when(t == 0)
    def _init():
        acc_ref[...] = jnp.zeros_like(acc_ref)

    # Streaming temporal-sum accumulation (VPU adds, hidden under the tile DMA).
    feat = feat_ref[...].astype(jnp.float32)            # (tile_b, tile_t, D_IN)

    if t_total % tile_t != 0:
        # Ragged last tile: zero rows past the true sequence length (replaces
        # the removed wrapper-side zero padding).  Static no-op when T divides.
        limit = t_total - t * tile_t                    # may exceed tile_t: fine
        idx = jax.lax.broadcasted_iota(jnp.int32, feat.shape, 1)
        feat = jnp.where(idx < limit, feat, 0.0)

    acc_ref[...] += jnp.sum(feat, axis=1)               # (tile_b, D_IN)

    @pl.when(t == pl.num_programs(1) - 1)
    def _finalize():
        # mean over the ORIGINAL T (single scalar multiply, not per-tile div).
        pooled = acc_ref[...] * inv_t

        # head[0]: Linear(768, 384); head[1]: ReLU; head[2]: Dropout = identity
        h = jnp.dot(pooled, w1_ref[...],
                    preferred_element_type=jnp.float32) + b1_ref[...]
        h = jnp.maximum(h, 0.0)

        # head[3]: Linear(384, 2), zero-padded to 128 output lanes.
        out_ref[...] = jnp.dot(h, w2_ref[...],
                               preferred_element_type=jnp.float32) + b2_ref[...]


def prepare_head_params(w1, b1, w2, b2):
    """One-time parameter prep (done at init, not per forward call)."""
    w1p = jnp.asarray(w1, jnp.float32)                               # (768, 384)
    b1r = jnp.reshape(jnp.asarray(b1, jnp.float32), (1, D_HID))
    w2p = jnp.zeros((D_HID, D_OUT_PAD), jnp.float32).at[:, :D_OUT].set(
        jnp.asarray(w2, jnp.float32))
    b2p = jnp.zeros((1, D_OUT_PAD), jnp.float32).at[:, :D_OUT].set(
        jnp.asarray(b2, jnp.float32))
    return w1p, b1r, w2p, b2p


def _vmem_budgets():
    """(per-feature-buffer budget, scoped VMEM limit) per TPU generation."""
    try:
        info = pltpu.get_tpu_info()
        vmem_bytes = int(getattr(info, "vmem_capacity_bytes", 64 * 1024 * 1024))
    except Exception:
        vmem_bytes = 64 * 1024 * 1024
    if vmem_bytes >= 96 * 1024 * 1024:            # v5e / v6e: 128 MiB physical
        return 20 * 1024 * 1024, 64 * 1024 * 1024
    return 12 * 1024 * 1024, 48 * 1024 * 1024     # v7x: 64 MiB per TensorCore


def _choose_tiles(B, T, itemsize, budget_bytes):
    # Whole batch in one block when small (leading dim of a 3-D block has no
    # (8,128) constraint -> no B round-up / no extra HBM reads); chunk in
    # sublane-dense pieces when large.
    tile_b = B if B <= 64 else 64

    # Time-tile granularity follows the dtype's sublane packing (16 for bf16).
    t_gran = 16 if itemsize == 2 else 8
    tile_t = budget_bytes // (tile_b * D_IN * itemsize)
    tile_t = max((tile_t // t_gran) * t_gran, t_gran)
    if T >= t_gran:
        tile_t = min(tile_t, (T // t_gran) * t_gran)   # never exceed T
    else:
        tile_t = T                                     # tiny T: full-dim block
    return tile_b, tile_t


def deepfake_classifier_forward(features, mask, w1p, b1r, w2p, b2p,
                                *, tile_t=None):
    """features: (B, T, 768) float32 or bfloat16 (BEATs backbone output).
    mask: (B, T) bool — only consumed inside BEATs in the reference."""
    del mask  # TODO(synk): consumed only by BEATs.extract_features in reference
    B, T, D = features.shape
    assert D == D_IN

    itemsize = jnp.dtype(features.dtype).itemsize
    budget_bytes, vmem_limit = _vmem_budgets()
    tile_b, auto_tile_t = _choose_tiles(B, T, itemsize, budget_bytes)
    if tile_t is None:
        tile_t = auto_tile_t

    n_b = pl.cdiv(B, tile_b)
    n_t = pl.cdiv(T, tile_t)

    kernel = functools.partial(
        classifier_kernel, inv_t=1.0 / float(T), tile_t=tile_t, t_total=T)

    flops = int(B * T * D_IN                                   # temporal sum
                + 2 * B * (D_IN * D_HID + D_HID * D_OUT_PAD)   # MLP head
                + B * D_HID)                                   # ReLU
    bytes_accessed = int(
        B * T * D_IN * itemsize                                # feature stream
        + (D_IN * D_HID + D_HID * D_OUT_PAD + D_HID + D_OUT_PAD) * 4  # weights
        + B * D_OUT_PAD * 4)                                   # output

    out_padded = pl.pallas_call(
        kernel,
        out_shape=jax.ShapeDtypeStruct((B, D_OUT_PAD), jnp.float32),
        grid=(n_b, n_t),
        in_specs=[
            pl.BlockSpec((tile_b, tile_t, D_IN), lambda b, t: (b, t, 0)),
            pl.BlockSpec((D_IN, D_HID), lambda b, t: (0, 0)),
            pl.BlockSpec((1, D_HID), lambda b, t: (0, 0)),
            pl.BlockSpec((D_HID, D_OUT_PAD), lambda b, t: (0, 0)),
            pl.BlockSpec((1, D_OUT_PAD), lambda b, t: (0, 0)),
        ],
        out_specs=pl.BlockSpec((tile_b, D_OUT_PAD), lambda b, t: (b, 0)),
        scratch_shapes=[pltpu.VMEM((tile_b, D_IN), jnp.float32)],
        compiler_params=pltpu.CompilerParams(
            dimension_semantics=("parallel", "arbitrary"),
            vmem_limit_bytes=vmem_limit,
        ),
        cost_estimate=pl.CostEstimate(
            flops=flops, transcendentals=0, bytes_accessed=bytes_accessed),
    )(features, w1p, b1r, w2p, b2p)

    return out_padded[:, :D_OUT]


def init_head_params(key):
    """Deterministic init mimicking torch.nn.Linear default U[-1/sqrt(fan_in), +]."""
    k1, k2, k3, k4 = jax.random.split(key, 4)
    bound1 = 1.0 / jnp.sqrt(jnp.float32(D_IN))
    bound2 = 1.0 / jnp.sqrt(jnp.float32(D_HID))
    w1 = jax.random.uniform(k1, (D_IN, D_HID), jnp.float32, -bound1, bound1)
    b1 = jax.random.uniform(k2, (D_HID,), jnp.float32, -bound1, bound1)
    w2 = jax.random.uniform(k3, (D_HID, D_OUT), jnp.float32, -bound2, bound2)
    b2 = jax.random.uniform(k4, (D_OUT,), jnp.float32, -bound2, bound2)
    return w1, b1, w2, b2


def reference_forward(features, w1, b1, w2, b2):
    pooled = jnp.mean(features.astype(jnp.float32), axis=1)
    h = jnp.maximum(pooled @ w1 + b1, 0.0)
    return h @ w2 + b2


if __name__ == "__main__":
    key = jax.random.PRNGKey(0)
    k_feat, k_params = jax.random.split(key)

    # Small shapes: batch=2, T=12 time frames, feature dim fixed at 768.
    # T=12 deliberately does NOT divide the f32 time tile (8) so the in-kernel
    # ragged-tile masking path is exercised.
    B, T = 2, 12
    features = jax.random.normal(k_feat, (B, T, D_IN), jnp.float32)
    mask = jnp.zeros((B, T), dtype=jnp.bool_)   # consumed only inside BEATs

    w1, b1, w2, b2 = init_head_params(k_params)
    w1p, b1r, w2p, b2p = prepare_head_params(w1, b1, w2, b2)   # once, at init

    # f32 feature path.
    logits = deepfake_classifier_forward(features, mask, w1p, b1r, w2p, b2p)
    logits = jax.block_until_ready(logits)
    ref = reference_forward(features, w1, b1, w2, b2)
    assert logits.shape == (B, D_OUT)
    # Tolerance covers TPU default-precision (bf16-pass) MXU matmuls in both
    # the kernel and the jnp reference.
    assert jnp.allclose(logits, ref, atol=2e-3, rtol=2e-3)

    # bf16 feature-streaming path (halves HBM traffic of the dominant stream).
    feat_bf16 = features.astype(jnp.bfloat16)
    logits_bf16 = deepfake_classifier_forward(feat_bf16, mask,
                                              w1p, b1r, w2p, b2p)
    logits_bf16 = jax.block_until_ready(logits_bf16)
    ref_bf16 = reference_forward(feat_bf16, w1, b1, w2, b2)
    assert logits_bf16.shape == (B, D_OUT)
    assert jnp.allclose(logits_bf16, ref_bf16, atol=2e-3, rtol=2e-3)

    print("KERNEL_OK")
</pallas_src>

<mosaic_0001>
module attributes {stable_mosaic.version = 11 : i64} {
  func.func @classifier_kernel(%arg0: i32, %arg1: i32, %arg2: memref<2x8x768xf32, #tpu.memory_space<vmem>>, %arg3: memref<768x384xf32, #tpu.memory_space<vmem>>, %arg4: memref<1x384xf32, #tpu.memory_space<vmem>>, %arg5: memref<384x128xf32, #tpu.memory_space<vmem>>, %arg6: memref<1x128xf32, #tpu.memory_space<vmem>>, %arg7: memref<2x128xf32, #tpu.memory_space<vmem>>, %arg8: memref<2x768xf32, #tpu.memory_space<vmem>>) attributes {dimension_semantics = [#tpu.dimension_semantics<parallel>, #tpu.dimension_semantics<arbitrary>], iteration_bounds = array<i64: 1, 2>, scalar_prefetch = 0 : i64, scratch_operands = 1 : i64, tpu.core_type = #tpu.core_type<tc>, window_params = [{transform_indices = @transform_0, window_bounds = array<i64: 2, 8, 768>}, {pipeline_mode = #tpu.pipeline_mode<synchronous>, transform_indices = @transform_1, window_bounds = array<i64: 768, 384>}, {pipeline_mode = #tpu.pipeline_mode<synchronous>, transform_indices = @transform_2, window_bounds = array<i64: 1, 384>}, {pipeline_mode = #tpu.pipeline_mode<synchronous>, transform_indices = @transform_3, window_bounds = array<i64: 384, 128>}, {pipeline_mode = #tpu.pipeline_mode<synchronous>, transform_indices = @transform_4, window_bounds = array<i64: 1, 128>}, {transform_indices = @transform_5, window_bounds = array<i64: 2, 128>}]} {
    %c0_i32 = arith.constant 0 : i32
    %0 = arith.cmpi eq, %arg1, %c0_i32 : i32
    %1 = arith.extui %0 : i1 to i32
    %c0_i32_0 = arith.constant 0 : i32
    %2 = arith.cmpi ne, %1, %c0_i32_0 : i32
    scf.if %2 {
      %cst_9 = arith.constant 0.000000e+00 : f32
      %18 = vector.broadcast %cst_9 : f32 to vector<2x768xf32>
      %c0_10 = arith.constant 0 : index
      %c0_11 = arith.constant 0 : index
      %19 = vector.load %arg8[%c0_10, %c0_11] : memref<2x768xf32, #tpu.memory_space<vmem>>, vector<2x768xf32>
      tpu.vector_store %arg8[%c0_10, %c0_11], %18 {strides = array<i32>} : memref<2x768xf32, #tpu.memory_space<vmem>>, vector<2x768xf32>,
    } else {
    }
    %c0 = arith.constant 0 : index
    %c0_1 = arith.constant 0 : index
    %c0_2 = arith.constant 0 : index
    %3 = vector.load %arg2[%c0, %c0_1, %c0_2] : memref<2x8x768xf32, #tpu.memory_space<vmem>>, vector<2x8x768xf32>
    %c8_i32 = arith.constant 8 : i32
    %4 = arith.muli %arg1, %c8_i32 : i32
    %c12_i32 = arith.constant 12 : i32
    %5 = arith.subi %c12_i32, %4 : i32
    %6 = tpu.iota {dimensions = array<i32: 1>} : vector<2x8x768xi32>
    %7 = vector.broadcast %5 : i32 to vector<2x8x768xi32>
    %8 = arith.cmpi slt, %6, %7 : vector<2x8x768xi32>
    %cst = arith.constant 0.000000e+00 : f32
    %9 = vector.broadcast %cst : f32 to vector<2x8x768xf32>
    %10 = arith.select %8, %3, %9 : vector<2x8x768xi1>, vector<2x8x768xf32>
    %c0_3 = arith.constant 0 : index
    %c0_4 = arith.constant 0 : index
    %11 = vector.load %arg8[%c0_3, %c0_4] : memref<2x768xf32, #tpu.memory_space<vmem>>, vector<2x768xf32>
    %cst_5 = arith.constant dense<0.000000e+00> : vector<2x768xf32>
    %12 = vector.multi_reduction <add>, %10, %cst_5 [1] : vector<2x8x768xf32> to vector<2x768xf32>
    %13 = arith.addf %11, %12 : vector<2x768xf32>
    %c0_6 = arith.constant 0 : index
    %c0_7 = arith.constant 0 : index
    %14 = vector.load %arg8[%c0_6, %c0_7] : memref<2x768xf32, #tpu.memory_space<vmem>>, vector<2x768xf32>
    tpu.vector_store %arg8[%c0_6, %c0_7], %13 {strides = array<i32>} : memref<2x768xf32, #tpu.memory_space<vmem>>, vector<2x768xf32>,
    %c1_i32 = arith.constant 1 : i32
    %15 = arith.cmpi eq, %arg1, %c1_i32 : i32
    %16 = arith.extui %15 : i1 to i32
    %c0_i32_8 = arith.constant 0 : i32
    %17 = arith.cmpi ne, %16, %c0_i32_8 : i32
    scf.if %17 {
      %c0_9 = arith.constant 0 : index
      %c0_10 = arith.constant 0 : index
      %18 = vector.load %arg8[%c0_9, %c0_10] : memref<2x768xf32, #tpu.memory_space<vmem>>, vector<2x768xf32>
      %cst_11 = arith.constant 0.0833333358 : f32
      %19 = vector.broadcast %cst_11 : f32 to vector<2x768xf32>
      %20 = arith.mulf %18, %19 : vector<2x768xf32>
      %c0_12 = arith.constant 0 : index
      %c0_13 = arith.constant 0 : index
      %21 = vector.load %arg3[%c0_12, %c0_13] : memref<768x384xf32, #tpu.memory_space<vmem>>, vector<768x384xf32>
      %cst_14 = arith.constant dense<0.000000e+00> : vector<2x384xf32>
      %22 = tpu.matmul %20, %21, %cst_14 {dimension_numbers = #tpu.dot_dimension_numbers<[1], [0], [0], [1], [0, 0, 1, 1], [], []>} : vector<2x768xf32>, vector<768x384xf32>, vector<2x384xf32> -> vector<2x384xf32>
      %c0_15 = arith.constant 0 : index
      %c0_16 = arith.constant 0 : index
      %23 = vector.load %arg4[%c0_15, %c0_16] : memref<1x384xf32, #tpu.memory_space<vmem>>, vector<1x384xf32>
      %24 = vector.broadcast %23 : vector<1x384xf32> to vector<2x384xf32>
      %25 = arith.addf %22, %24 : vector<2x384xf32>
      %cst_17 = arith.constant 0.000000e+00 : f32
      %26 = vector.broadcast %cst_17 : f32 to vector<2x384xf32>
      %27 = arith.maximumf %25, %26 : vector<2x384xf32>
      %c0_18 = arith.constant 0 : index
      %c0_19 = arith.constant 0 : index
      %28 = vector.load %arg5[%c0_18, %c0_19] : memref<384x128xf32, #tpu.memory_space<vmem>>, vector<384x128xf32>
      %cst_20 = arith.constant dense<0.000000e+00> : vector<2x128xf32>
      %29 = tpu.matmul %27, %28, %cst_20 {dimension_numbers = #tpu.dot_dimension_numbers<[1], [0], [0], [1], [0, 0, 1, 1], [], []>} : vector<2x384xf32>, vector<384x128xf32>, vector<2x128xf32> -> vector<2x128xf32>
      %c0_21 = arith.constant 0 : index
      %c0_22 = arith.constant 0 : index
      %30 = vector.load %arg6[%c0_21, %c0_22] : memref<1x128xf32, #tpu.memory_space<vmem>>, vector<1x128xf32>
      %31 = vector.broadcast %30 : vector<1x128xf32> to vector<2x128xf32>
      %32 = arith.addf %29, %31 : vector<2x128xf32>
      %c0_23 = arith.constant 0 : index
      %c0_24 = arith.constant 0 : index
      %33 = vector.load %arg7[%c0_23, %c0_24] : memref<2x128xf32, #tpu.memory_space<vmem>>, vector<2x128xf32>
      tpu.vector_store %arg7[%c0_23, %c0_24], %32 {strides = array<i32>} : memref<2x128xf32, #tpu.memory_space<vmem>>, vector<2x128xf32>,
    } else {
    }
    return
  }
  func.func @transform_0(%arg0: i32, %arg1: i32) -> (i32, i32, i32) {
    %c0_i32 = arith.constant 0 : i32
    %c0_i32_0 = arith.constant 0 : i32
    return %arg0, %arg1, %c0_i32 : i32, i32, i32
  }
  func.func @transform_1(%arg0: i32, %arg1: i32) -> (i32, i32) {
    %c0_i32 = arith.constant 0 : i32
    %c0_i32_0 = arith.constant 0 : i32
    %c0_i32_1 = arith.constant 0 : i32
    return %c0_i32, %c0_i32_0 : i32, i32
  }
  func.func @transform_2(%arg0: i32, %arg1: i32) -> (i32, i32) {
    %c0_i32 = arith.constant 0 : i32
    %c0_i32_0 = arith.constant 0 : i32
    %c0_i32_1 = arith.constant 0 : i32
    return %c0_i32, %c0_i32_0 : i32, i32
  }
  func.func @transform_3(%arg0: i32, %arg1: i32) -> (i32, i32) {
    %c0_i32 = arith.constant 0 : i32
    %c0_i32_0 = arith.constant 0 : i32
    %c0_i32_1 = arith.constant 0 : i32
    return %c0_i32, %c0_i32_0 : i32, i32
  }
  func.func @transform_4(%arg0: i32, %arg1: i32) -> (i32, i32) {
    %c0_i32 = arith.constant 0 : i32
    %c0_i32_0 = arith.constant 0 : i32
    %c0_i32_1 = arith.constant 0 : i32
    return %c0_i32, %c0_i32_0 : i32, i32
  }
  func.func @transform_5(%arg0: i32, %arg1: i32) -> (i32, i32) {
    %c0_i32 = arith.constant 0 : i32
    %c0_i32_0 = arith.constant 0 : i32
    return %arg0, %c0_i32 : i32, i32
  }
}

</mosaic_0001>

<llo_original>
// kernel: tpu_custom_call.1
$region0: #{tpu_custom_call.1}
  #allocation0 [shape = 'u32[]', space=smem, size = 0x4, offset = 0x4, fixed_abs, tag = 'smem constant byte address 0x4 - core index']
  #allocation1 [shape = 'u32[144,128]{1,0:T(1,128)}', space=vmem, size = 0x12000, scoped, tag = 'internal scratch']
  #allocation2 [shape = 'f32[2,768]{1,0:T(2,128)}', space=vmem, size = 0x1800, scoped, tag = 'scratch operand']
  %s0 = inlined_call_operand.vmem [shape: f32[2,12,768], index: 0, kind: input, shape index: {}]
  %s1 = inlined_call_operand.hbm [shape: f32[768,384], index: 1, kind: input, shape index: {}]
  %s2 = inlined_call_operand.hbm [shape: f32[1,384], index: 2, kind: input, shape index: {}]
  %s3 = inlined_call_operand.hbm [shape: f32[384,128], index: 3, kind: input, shape index: {}]
  %s4 = inlined_call_operand.hbm [shape: f32[1,128], index: 4, kind: input, shape index: {}]
  %s5 = inlined_call_operand.hbm [shape: f32[2,128], index: 5, kind: output, shape index: {}]
  %s6 = sld [smem:[#allocation0]]
  $region100: #{tpu_custom_call.1} parent=0
    _
  %s8 = ssub.s32 1, %s6
  %s9 = scalar_select 0, %s8, %s6
  $region1: #{tpu_custom_call.1} parent=0
    #allocation3 [shape = 'u8[98304]{0}', space=vmem, size = 0x18000, scoped, tag = 'input window, operand 0']
    #allocation4 [shape = 'u8[1179648]{0}', space=vmem, size = 0x120000, scoped, tag = 'input window, operand 1, single buffered']
    #allocation5 [shape = 's32[2]{0}', space=sflag, size = 0x8, scoped, tag = 'scoped memory for tpu_custom_call.1']
    #allocation6 [shape = 's32[2]{0}', space=sflag, size = 0x8, scoped, tag = 'scoped memory for tpu_custom_call.1']
    #allocation7 [shape = 'u8[1536]{0}', space=vmem, size = 0x800, scoped, tag = 'input window, operand 2, single buffered']
    #allocation8 [shape = 's32[1]{0}', space=sflag, size = 0x4, scoped, tag = 'scoped memory for tpu_custom_call.1']
    #allocation9 [shape = 'u8[196608]{0}', space=vmem, size = 0x30000, scoped, tag = 'input window, operand 3, single buffered']
    #allocation10 [shape = 'u8[512]{0}', space=vmem, size = 0x400, scoped, tag = 'input window, operand 4, single buffered']
    #allocation11 [shape = 's32[1]{0}', space=sflag, size = 0x4, scoped, tag = 'scoped memory for tpu_custom_call.1']
    #allocation12 [shape = 'u8[1024]{0}', space=vmem, size = 0x400, scoped, tag = 'output window, operand 0, single buffered']
    %10 = vsyncpa [#allocation5], 0
    %11 = vsyncpa [#allocation8], 0
    %12 = vsyncpa [#allocation11], 0
    %13 = vsyncpa [#allocation6], 0
    loop: start=0, step=1, limit=4
    $region2: #{tpu_custom_call.1} parent=1 // loop_pre_header
      _
    $region3: #{tpu_custom_call.1} parent=1 // loop_header
      %s15 = sphi 0, %s19
      %p16 = scmp.ge.s32.totalorder %s15, 4
      %s22 = sphi 0, %s34
      %s23 = sphi 0, %s30
      %s24 = sphi 0, %s22
      %s25 = sphi 0, %s23
      %s26 = sphi 0, %s24
      %s27 = sphi 0, %s25
      %s39 = sphi 0, %s41
      %s42 = sphi 0, %s39
      %s43 = sphi 0, %s42
      %s59 = sphi 0, %s43
      %s63 = sphi 0, %s63
      %s65 = sphi 0, %s63
      %s66 = sphi 0, %s65
      %s80 = sphi 0, %s66
      %s84 = sphi 0, %s84
      %s86 = sphi 0, %s84
      %s87 = sphi 0, %s86
      %s101 = sphi 0, %s87
      %s105 = sphi 0, %s105
      %s107 = sphi 0, %s105
      %s108 = sphi 0, %s107
      %s122 = sphi 0, %s108
      %s126 = sphi 0, %s126
      %s128 = sphi 0, %s126
      %s129 = sphi 0, %s128
      %s143 = sphi 0, %s129
      %s149 = sphi 0, %s151
      %s152 = sphi 0, %s149
      %s153 = sphi 0, %s152
      %s169 = sphi 0, %s153
    $region4: #{tpu_custom_call.1} parent=1 // loop_header_branch
      %18 = sbr.rel (%p16) target = $region8
    $region5: #{tpu_custom_call.1} parent=1 // loop_body
      %s20 = ssub.s32 %s15, 1
      %s21 = ssub.s32 %s15, 2
      %s28 = sadd.s32 1, %s23
      %p29 = scmp.ge.s32.totalorder %s28, 2
      %s30 = scalar_select %p29, 0, %s28
      %s31 = sadd.s32 1, %s22
      %s32 = scalar_select %p29, %s31, %s22
      %p33 = scmp.ge.s32.totalorder %s32, 1
      %s34 = scalar_select %p33, 0, %s32
      %s35 = ssub.s32 %s22, %s34
      %s36 = ssub.s32 %s23, %s30
      %s37 = sor.u32 %s35, %s36
      %p38 = scmp.eq.s32.totalorder %s37, 0
      %s40 = sadd.s32 %s39, 1
      %s41 = scalar_select %p38, %s39, %s40
      %p44 = pneg %p38
      %p45 = scmp.eq.s32.totalorder %s15, 1
      %p46 = por %p44, %p45
      %p47 = scmp.ne.s32.totalorder %s39, %s42
      %p48 = scmp.eq.s32.totalorder %s15, 0
      %p49 = por %p47, %p48
      %p50 = scmp.ne.s32.totalorder %s39, %s42
      %p51 = scmp.eq.s32.totalorder %s20, 1
      %p52 = por %p50, %p51
      %p53 = scmp.ne.s32.totalorder %s42, %s43
      %p54 = scmp.eq.s32.totalorder %s20, 0
      %p55 = por %p53, %p54
      %p56 = scmp.ne.s32.totalorder %s42, %s43
      %p57 = scmp.eq.s32.totalorder %s21, 1
      %p58 = por %p56, %p57
      %p60 = scmp.ne.s32.totalorder %s43, %s59
      %p61 = scmp.eq.s32.totalorder %s21, 0
      %p62 = por %p60, %p61
      %s64 = sadd.s32 %s63, 1
      %p67 = scmp.eq.s32.totalorder %s15, 1
      %p68 = scmp.ne.s32.totalorder %s63, %s65
      %p69 = scmp.eq.s32.totalorder %s15, 0
      %p70 = por %p68, %p69
      %p71 = scmp.ne.s32.totalorder %s63, %s65
      %p72 = scmp.eq.s32.totalorder %s20, 1
      %p73 = por %p71, %p72
      %p74 = scmp.ne.s32.totalorder %s65, %s66
      %p75 = scmp.eq.s32.totalorder %s20, 0
      %p76 = por %p74, %p75
      %p77 = scmp.ne.s32.totalorder %s65, %s66
      %p78 = scmp.eq.s32.totalorder %s21, 1
      %p79 = por %p77, %p78
      %p81 = scmp.ne.s32.totalorder %s66, %s80
      %p82 = scmp.eq.s32.totalorder %s21, 0
      %p83 = por %p81, %p82
      %s85 = sadd.s32 %s84, 1
      %p88 = scmp.eq.s32.totalorder %s15, 1
      %p89 = scmp.ne.s32.totalorder %s84, %s86
      %p90 = scmp.eq.s32.totalorder %s15, 0
      %p91 = por %p89, %p90
      %p92 = scmp.ne.s32.totalorder %s84, %s86
      %p93 = scmp.eq.s32.totalorder %s20, 1
      %p94 = por %p92, %p93
      %p95 = scmp.ne.s32.totalorder %s86, %s87
      %p96 = scmp.eq.s32.totalorder %s20, 0
      %p97 = por %p95, %p96
      %p98 = scmp.ne.s32.totalorder %s86, %s87
      %p99 = scmp.eq.s32.totalorder %s21, 1
      %p100 = por %p98, %p99
      %p102 = scmp.ne.s32.totalorder %s87, %s101
      %p103 = scmp.eq.s32.totalorder %s21, 0
      %p104 = por %p102, %p103
      %s106 = sadd.s32 %s105, 1
      %p109 = scmp.eq.s32.totalorder %s15, 1
      %p110 = scmp.ne.s32.totalorder %s105, %s107
      %p111 = scmp.eq.s32.totalorder %s15, 0
      %p112 = por %p110, %p111
      %p113 = scmp.ne.s32.totalorder %s105, %s107
      %p114 = scmp.eq.s32.totalorder %s20, 1
      %p115 = por %p113, %p114
      %p116 = scmp.ne.s32.totalorder %s107, %s108
      %p117 = scmp.eq.s32.totalorder %s20, 0
      %p118 = por %p116, %p117
      %p119 = scmp.ne.s32.totalorder %s107, %s108
      %p120 = scmp.eq.s32.totalorder %s21, 1
      %p121 = por %p119, %p120
      %p123 = scmp.ne.s32.totalorder %s108, %s122
      %p124 = scmp.eq.s32.totalorder %s21, 0
      %p125 = por %p123, %p124
      %s127 = sadd.s32 %s126, 1
      %p130 = scmp.eq.s32.totalorder %s15, 1
      %p131 = scmp.ne.s32.totalorder %s126, %s128
      %p132 = scmp.eq.s32.totalorder %s15, 0
      %p133 = por %p131, %p132
      %p134 = scmp.ne.s32.totalorder %s126, %s128
      %p135 = scmp.eq.s32.totalorder %s20, 1
      %p136 = por %p134, %p135
      %p137 = scmp.ne.s32.totalorder %s128, %s129
      %p138 = scmp.eq.s32.totalorder %s20, 0
      %p139 = por %p137, %p138
      %p140 = scmp.ne.s32.totalorder %s128, %s129
      %p141 = scmp.eq.s32.totalorder %s21, 1
      %p142 = por %p140, %p141
      %p144 = scmp.ne.s32.totalorder %s129, %s143
      %p145 = scmp.eq.s32.totalorder %s21, 0
      %p146 = por %p144, %p145
      %s147 = ssub.s32 %s22, %s34
      %p148 = scmp.eq.s32.totalorder %s147, 0
      %s150 = sadd.s32 %s149, 1
      %s151 = scalar_select %p148, %s149, %s150
      %p154 = pneg %p148
      %p155 = scmp.eq.s32.totalorder %s15, 1
      %p156 = por %p154, %p155
      %p157 = scmp.ne.s32.totalorder %s149, %s152
      %p158 = scmp.eq.s32.totalorder %s15, 0
      %p159 = por %p157, %p158
      %p160 = scmp.ne.s32.totalorder %s149, %s152
      %p161 = scmp.eq.s32.totalorder %s20, 1
      %p162 = por %p160, %p161
      %p163 = scmp.ne.s32.totalorder %s152, %s153
      %p164 = scmp.eq.s32.totalorder %s20, 0
      %p165 = por %p163, %p164
      %p166 = scmp.ne.s32.totalorder %s152, %s153
      %p167 = scmp.eq.s32.totalorder %s21, 1
      %p168 = por %p166, %p167
      %p170 = scmp.ne.s32.totalorder %s153, %s169
      %p171 = scmp.eq.s32.totalorder %s21, 0
      %p172 = por %p170, %p171
      %p173 = scmp.le.s32.totalorder 1, %s15
      %p174 = scmp.lt.s32.totalorder %s15, 3
      %p175 = pnand %p173, %p174
      %p176 = pneg %p175
      // Predicated region
      $region9: #{tpu_custom_call.1} parent=5 // pred_check
        _
      $region10: #{tpu_custom_call.1} parent=5 // pred_check_branch
        %178 = sbr.rel (%p175) target = $region12
      $region11: #{tpu_custom_call.1} parent=5 // pred_region
        %s179 = ssub.s32 %s15, 1
        // Predicated region
        $region13: #{tpu_custom_call.1} parent=11 // pred_check
          %p180 = pneg %p76
        $region14: #{tpu_custom_call.1} parent=11 // pred_check_branch
          %182 = sbr.rel (%p180) target = $region16
        $region15: #{tpu_custom_call.1} parent=11 // pred_region
          %s184 = ssub.s32 36864, 36864
          %185 = vsyncadd [#allocation5], %s184
          %s186 = sshll.u32 [#allocation4], 4
          %s187 = int_to_ptr.vmem [resolvable:$true] %s186
          %192 = dma.hbm_to_vmem [thread:$0]  %s1, 36864, %s187, [#allocation5], 384, 384, 24
        $region16: #{tpu_custom_call.1} parent=11 // pred_fallthru
          _
        // Predicated region
        $region17: #{tpu_custom_call.1} parent=11 // pred_check
          %p193 = pneg %p97
        $region18: #{tpu_custom_call.1} parent=11 // pred_check_branch
          %195 = sbr.rel (%p193) target = $region20
        $region19: #{tpu_custom_call.1} parent=11 // pred_region
          %s197 = ssub.s32 48, 48
          %198 = vsyncadd [#allocation8], %s197
          %s200 = sshll.u32 [#allocation7], 4
          %s201 = int_to_ptr.vmem [resolvable:$true] %s200
          %203 = dma.hbm_to_vmem [thread:$0]  %s2, 48, %s201, [#allocation8]
        $region20: #{tpu_custom_call.1} parent=11 // pred_fallthru
          _
        // Predicated region
        $region21: #{tpu_custom_call.1} parent=11 // pred_check
          %p204 = pneg %p118
        $region22: #{tpu_custom_call.1} parent=11 // pred_check_branch
          %206 = sbr.rel (%p204) target = $region24
        $region23: #{tpu_custom_call.1} parent=11 // pred_region
          %s208 = ssub.s32 6144, 6144
          %209 = vsyncadd [#allocation8], %s208
          %s210 = sshll.u32 [#allocation9], 4
          %s211 = int_to_ptr.vmem [resolvable:$true] %s210
          %216 = dma.hbm_to_vmem [thread:$0]  %s3, 6144, %s211, [#allocation8], 128, 128, 8
        $region24: #{tpu_custom_call.1} parent=11 // pred_fallthru
          _
        // Predicated region
        $region25: #{tpu_custom_call.1} parent=11 // pred_check
          %p217 = pneg %p139
        $region26: #{tpu_custom_call.1} parent=11 // pred_check_branch
          %219 = sbr.rel (%p217) target = $region28
        $region27: #{tpu_custom_call.1} parent=11 // pred_region
          %s221 = ssub.s32 16, 16
          %222 = vsyncadd [#allocation11], %s221
          %s224 = sshll.u32 [#allocation10], 4
          %s225 = int_to_ptr.vmem [resolvable:$true] %s224
          %227 = dma.hbm_to_vmem [thread:$0]  %s4, 16, %s225, [#allocation11]
        $region28: #{tpu_custom_call.1} parent=11 // pred_fallthru
          _
      $region12: #{tpu_custom_call.1} parent=5 // pred_fallthru
        _
      %p228 = scmp.lt.s32.totalorder %s15, 2
      // Predicated region
      $region29: #{tpu_custom_call.1} parent=5 // pred_check
        %p229 = pneg %p228
      $region30: #{tpu_custom_call.1} parent=5 // pred_check_branch
        %231 = sbr.rel (%p229) target = $region32
      $region31: #{tpu_custom_call.1} parent=5 // pred_region
        // Predicated region
        $region33: #{tpu_custom_call.1} parent=31 // pred_check
          %p232 = pneg %p49
        $region34: #{tpu_custom_call.1} parent=31 // pred_check_branch
          %234 = sbr.rel (%p232) target = $region36
        $region35: #{tpu_custom_call.1} parent=31 // pred_region
          %s235 = sand.u32 %s39, 1
          %s236 = sand.u32 %s39, 1
          %s237 = smul.addr %s236, 96
          %s238 = scalar_lea.vmem [#allocation3], %s237
          %s239 = smul.u32 2, %s22
          %s240 = smul.addr %s23, 6
          %s241 = smul.addr %s239, 12
          %s242 = sadd.s32 %s240, %s241
          %s243 = smul.addr %s242, 8
          %s244 = scalar_lea.vmem %s0, %s243
          // Predicated region
          $region37: #{tpu_custom_call.1} parent=35 // pred_check
            _
          $region38: #{tpu_custom_call.1} parent=35 // pred_check_branch
            %246 = sbr.rel (0) target = $region40
          $region39: #{tpu_custom_call.1} parent=35 // pred_region
            // Predicated region
            $region41: #{tpu_custom_call.1} parent=39 // pred_check
              _
            $region42: #{tpu_custom_call.1} parent=39 // pred_check_branch
              %248 = sbr.rel (0) target = $region44
            $region43: #{tpu_custom_call.1} parent=39 // pred_region
              loop: start=0, step=1, limit=1
              $region45: #{tpu_custom_call.1} parent=43 // loop_pre_header
                _
              $region46: #{tpu_custom_call.1} parent=43 // loop_header
                %s250 = sphi 0, %s254
                %p251 = scmp.ge.s32.totalorder %s250, 1
                %s255 = sphi %s244, %s244
                %s256 = sphi %s238, %s238
              $region47: #{tpu_custom_call.1} parent=43 // loop_header_branch
                %253 = sbr.rel (%p251) target = $region51
              $region48: #{tpu_custom_call.1} parent=43 // loop_body
                %v257 = vld [vmem:[%s255] sm:$0xff]
                %258 = vst [vmem:[%s256] sm:$0xff] %v257
                %v259 = vld [vmem:[%s255 + $0x8] sm:$0xff]
                %260 = vst [vmem:[%s256 + $0x8] sm:$0xff] %v259
                %v261 = vld [vmem:[%s255 + $0x10] sm:$0xff]
                %262 = vst [vmem:[%s256 + $0x10] sm:$0xff] %v261
                %v263 = vld [vmem:[%s255 + $0x18] sm:$0xff]
                %264 = vst [vmem:[%s256 + $0x18] sm:$0xff] %v263
                %v265 = vld [vmem:[%s255 + $0x20] sm:$0xff]
                %266 = vst [vmem:[%s256 + $0x20] sm:$0xff] %v265
                %v267 = vld [vmem:[%s255 + $0x28] sm:$0xff]
                %268 = vst [vmem:[%s256 + $0x28] sm:$0xff] %v267
                %v269 = vld [vmem:[%s255 + $0x60] sm:$0xff]
                %270 = vst [vmem:[%s256 + $0x30] sm:$0xff] %v269
                %v271 = vld [vmem:[%s255 + $0x68] sm:$0xff]
                %272 = vst [vmem:[%s256 + $0x38] sm:$0xff] %v271
                %v273 = vld [vmem:[%s255 + $0x70] sm:$0xff]
                %274 = vst [vmem:[%s256 + $0x40] sm:$0xff] %v273
                %v275 = vld [vmem:[%s255 + $0x78] sm:$0xff]
                %276 = vst [vmem:[%s256 + $0x48] sm:$0xff] %v275
                %v277 = vld [vmem:[%s255 + $0x80] sm:$0xff]
                %278 = vst [vmem:[%s256 + $0x50] sm:$0xff] %v277
                %v279 = vld [vmem:[%s255 + $0x88] sm:$0xff]
                %280 = vst [vmem:[%s256 + $0x58] sm:$0xff] %v279
              $region49: #{tpu_custom_call.1} parent=43 // loop_footer
                %s254 = sadd.s32 1, %s250
              $region50: #{tpu_custom_call.1} parent=43 // loop_footer_branch
                %249 = sbr.rel target = $region46
              $region51: #{tpu_custom_call.1} parent=43 // loop_exit
                _
            $region44: #{tpu_custom_call.1} parent=39 // pred_fallthru
              _
            // Predicated region
            $region52: #{tpu_custom_call.1} parent=39 // pred_check
              _
            $region53: #{tpu_custom_call.1} parent=39 // pred_check_branch
              %282 = sbr.rel target = $region55
            $region54: #{tpu_custom_call.1} parent=39 // pred_region
              _
            $region55: #{tpu_custom_call.1} parent=39 // pred_fallthru
              _
          $region40: #{tpu_custom_call.1} parent=35 // pred_fallthru
            _
          %283 = vnop
        $region36: #{tpu_custom_call.1} parent=31 // pred_fallthru
          _
      $region32: #{tpu_custom_call.1} parent=5 // pred_fallthru
        _
      %p284 = scmp.le.s32.totalorder 1, %s15
      %p285 = scmp.lt.s32.totalorder %s15, 3
      %p286 = pnand %p284, %p285
      %p287 = pneg %p286
      // Predicated region
      $region56: #{tpu_custom_call.1} parent=5 // pred_check
        _
      $region57: #{tpu_custom_call.1} parent=5 // pred_check_branch
        %289 = sbr.rel (%p286) target = $region59
      $region58: #{tpu_custom_call.1} parent=5 // pred_region
        %s290 = ssub.s32 %s15, 1
        %s291 = sand.u32 %s42, 1
        %s292 = sand.u32 %s42, 1
        %s293 = smul.addr %s292, 96
        %s294 = scalar_lea.vmem [#allocation3], %s293
        // Predicated region
        $region60: #{tpu_custom_call.1} parent=58 // pred_check
          %p295 = pneg %p55
        $region61: #{tpu_custom_call.1} parent=58 // pred_check_branch
          %297 = sbr.rel (%p295) target = $region63
        $region62: #{tpu_custom_call.1} parent=58 // pred_region
          _
        $region63: #{tpu_custom_call.1} parent=58 // pred_fallthru
          _
        // Predicated region
        $region64: #{tpu_custom_call.1} parent=58 // pred_check
          %p298 = pneg %p76
        $region65: #{tpu_custom_call.1} parent=58 // pred_check_branch
          %300 = sbr.rel (%p298) target = $region67
        $region66: #{tpu_custom_call.1} parent=58 // pred_region
          %301 = dma.done [#allocation5], 36864
        $region67: #{tpu_custom_call.1} parent=58 // pred_fallthru
          _
        // Predicated region
        $region68: #{tpu_custom_call.1} parent=58 // pred_check
          %p302 = pneg %p97
        $region69: #{tpu_custom_call.1} parent=58 // pred_check_branch
          %304 = sbr.rel (%p302) target = $region71
        $region70: #{tpu_custom_call.1} parent=58 // pred_region
          %305 = dma.done [#allocation8], 48
        $region71: #{tpu_custom_call.1} parent=58 // pred_fallthru
          _
        // Predicated region
        $region72: #{tpu_custom_call.1} parent=58 // pred_check
          %p306 = pneg %p118
        $region73: #{tpu_custom_call.1} parent=58 // pred_check_branch
          %308 = sbr.rel (%p306) target = $region75
        $region74: #{tpu_custom_call.1} parent=58 // pred_region
          %309 = dma.done [#allocation8], 6144
        $region75: #{tpu_custom_call.1} parent=58 // pred_fallthru
          _
        // Predicated region
        $region76: #{tpu_custom_call.1} parent=58 // pred_check
          %p310 = pneg %p139
        $region77: #{tpu_custom_call.1} parent=58 // pred_check_branch
          %312 = sbr.rel (%p310) target = $region79
        $region78: #{tpu_custom_call.1} parent=58 // pred_region
          %313 = dma.done [#allocation11], 16
        $region79: #{tpu_custom_call.1} parent=58 // pred_fallthru
          _
        %s314 = sand.u32 %s42, 1
        %s315 = sand.u32 %s42, 1
        %s316 = smul.addr %s315, 96
        %s317 = scalar_lea.vmem [#allocation3], %s316
        %p318 = pneg %p55
        %p319 = pneg %p52
        %p320 = pneg %p76
        %p321 = pneg %p73
        %p322 = pneg %p97
        %p323 = pneg %p94
        %p324 = pneg %p118
        %p325 = pneg %p115
        %p326 = pneg %p139
        %p327 = pneg %p136
        %p328 = pneg %p165
        %p329 = pneg %p162
        %s330 = smul.u32 2, %s24
        %p331 = scmp.eq.s32.totalorder %s25, 0
        // Predicated region
        $region80: #{tpu_custom_call.1} parent=58 // pred_check
          %p332 = pneg %p331
        $region81: #{tpu_custom_call.1} parent=58 // pred_check_branch
          %334 = sbr.rel (%p332) target = $region83
        $region82: #{tpu_custom_call.1} parent=58 // pred_region
          %335 = vst [vmem:[#allocation2] sm:$0xff] 0.0
          %336 = vst [vmem:[#allocation2 + $0x8] sm:$0xf] 0.0
        $region83: #{tpu_custom_call.1} parent=58 // pred_fallthru
          _
        %v337 = vld [vmem:[%s294] sm:$0xff]
        %v338 = vld [vmem:[%s294 + $0x8] sm:$0xff]
        %v339 = vld [vmem:[%s294 + $0x10] sm:$0xff]
        %v340 = vld [vmem:[%s294 + $0x18] sm:$0xff]
        %v341 = vld [vmem:[%s294 + $0x20] sm:$0xff]
        %v342 = vld [vmem:[%s294 + $0x28] sm:$0xff]
        %v343 = vld [vmem:[%s294 + $0x30] sm:$0xff]
        %v344 = vld [vmem:[%s294 + $0x38] sm:$0xff]
        %v345 = vld [vmem:[%s294 + $0x40] sm:$0xff]
        %v346 = vld [vmem:[%s294 + $0x48] sm:$0xff]
        %v347 = vld [vmem:[%s294 + $0x50] sm:$0xff]
        %v348 = vld [vmem:[%s294 + $0x58] sm:$0xff]
        %s349 = smul.u32 %s25, 8
        %s350 = ssub.s32 12, %s349
        %v351 = vlaneseq
        %v352 = vshrl.u32 %v351, 7
        %v353 = vstv %s350
        %vm354 = vcmp.lt.s32.totalorder %v352, %v353
        %v355 = vsel %vm354, %v337, 0.0
        %v356 = vsel %vm354, %v338, 0.0
        %v357 = vsel %vm354, %v339, 0.0
        %v358 = vsel %vm354, %v340, 0.0
        %v359 = vsel %vm354, %v341, 0.0
        %v360 = vsel %vm354, %v342, 0.0
        %v361 = vsel %vm354, %v343, 0.0
        %v362 = vsel %vm354, %v344, 0.0
        %v363 = vsel %vm354, %v345, 0.0
        %v364 = vsel %vm354, %v346, 0.0
        %v365 = vsel %vm354, %v347, 0.0
        %v366 = vsel %vm354, %v348, 0.0
        %v367 = vld [vmem:[#allocation2] sm:$0xff]
        %v368 = vld [vmem:[#allocation2 + $0x8] sm:$0xf]
        %v369 = vrot.slane %v355, 4
        %v370 = vadd.f32 %v355, %v369
        %v371 = vrot.slane %v370, 2
        %v372 = vadd.f32 %v370, %v371
        %v373 = vrot.slane %v372, 1
        %v374 = vadd.f32 %v372, %v373
        %v375 = vrot.slane %v356, 4
        %v376 = vadd.f32 %v356, %v375
        %v377 = vrot.slane %v376, 2
        %v378 = vadd.f32 %v376, %v377
        %v379 = vrot.slane %v378, 1
        %v380 = vadd.f32 %v378, %v379
        %v381 = vrot.slane %v357, 4
        %v382 = vadd.f32 %v357, %v381
        %v383 = vrot.slane %v382, 2
        %v384 = vadd.f32 %v382, %v383
        %v385 = vrot.slane %v384, 1
        %v386 = vadd.f32 %v384, %v385
        %v387 = vrot.slane %v358, 4
        %v388 = vadd.f32 %v358, %v387
        %v389 = vrot.slane %v388, 2
        %v390 = vadd.f32 %v388, %v389
        %v391 = vrot.slane %v390, 1
        %v392 = vadd.f32 %v390, %v391
        %v393 = vrot.slane %v359, 4
        %v394 = vadd.f32 %v359, %v393
        %v395 = vrot.slane %v394, 2
        %v396 = vadd.f32 %v394, %v395
        %v397 = vrot.slane %v396, 1
        %v398 = vadd.f32 %v396, %v397
        %v399 = vrot.slane %v360, 4
        %v400 = vadd.f32 %v360, %v399
        %v401 = vrot.slane %v400, 2
        %v402 = vadd.f32 %v400, %v401
        %v403 = vrot.slane %v402, 1
        %v404 = vadd.f32 %v402, %v403
        %v405 = vrot.slane %v361, 4
        %v406 = vadd.f32 %v361, %v405
        %v407 = vrot.slane %v406, 2
        %v408 = vadd.f32 %v406, %v407
        %v409 = vrot.slane %v408, 1
        %v410 = vadd.f32 %v408, %v409
        %v411 = vrot.slane %v362, 4
        %v412 = vadd.f32 %v362, %v411
        %v413 = vrot.slane %v412, 2
        %v414 = vadd.f32 %v412, %v413
        %v415 = vrot.slane %v414, 1
        %v416 = vadd.f32 %v414, %v415
        %v417 = vrot.slane %v363, 4
        %v418 = vadd.f32 %v363, %v417
        %v419 = vrot.slane %v418, 2
        %v420 = vadd.f32 %v418, %v419
        %v421 = vrot.slane %v420, 1
        %v422 = vadd.f32 %v420, %v421
        %v423 = vrot.slane %v364, 4
        %v424 = vadd.f32 %v364, %v423
        %v425 = vrot.slane %v424, 2
        %v426 = vadd.f32 %v424, %v425
        %v427 = vrot.slane %v426, 1
        %v428 = vadd.f32 %v426, %v427
        %v429 = vrot.slane %v365, 4
        %v430 = vadd.f32 %v365, %v429
        %v431 = vrot.slane %v430, 2
        %v432 = vadd.f32 %v430, %v431
        %v433 = vrot.slane %v432, 1
        %v434 = vadd.f32 %v432, %v433
        %v435 = vrot.slane %v366, 4
        %v436 = vadd.f32 %v366, %v435
        %v437 = vrot.slane %v436, 2
        %v438 = vadd.f32 %v436, %v437
        %v439 = vrot.slane %v438, 1
        %v440 = vadd.f32 %v438, %v439
        %v453 = vcombine.low %v374, %v380
        %v454 = vcombine.low %v386, %v392
        %v456 = vunpack.c.l.s4 1983009808
        %v457 = vunpack.c.0.s8 %v456
        %v458 = vlaneseq
        %v459 = vshrl.u32 %v458, 7
        %v460 = vsub.s32 %v457, %v459
        %v461 = vrot.slane %v453, %v460
        %v463 = vunpack.c.l.s4 1983009808
        %v464 = vunpack.c.0.s8 %v463
        %v465 = vlaneseq
        %v466 = vshrl.u32 %v465, 7
        %v467 = vsub.s32 %v464, %v466
        %v468 = vrot.slane %v454, %v467
        %v469 = vcombine.low %v461, %v468
        %v470 = vcombine.low %v398, %v404
        %v472 = vunpack.c.l.s4 1983009808
        %v473 = vunpack.c.0.s8 %v472
        %v474 = vlaneseq
        %v475 = vshrl.u32 %v474, 7
        %v476 = vsub.s32 %v473, %v475
        %v477 = vrot.slane %v470, %v476
        %v478 = vcombine.low %v410, %v416
        %v479 = vcombine.low %v422, %v428
        %v481 = vunpack.c.l.s4 1983009808
        %v482 = vunpack.c.0.s8 %v481
        %v483 = vlaneseq
        %v484 = vshrl.u32 %v483, 7
        %v485 = vsub.s32 %v482, %v484
        %v486 = vrot.slane %v478, %v485
        %v488 = vunpack.c.l.s4 1983009808
        %v489 = vunpack.c.0.s8 %v488
        %v490 = vlaneseq
        %v491 = vshrl.u32 %v490, 7
        %v492 = vsub.s32 %v489, %v491
        %v493 = vrot.slane %v479, %v492
        %v494 = vcombine.low %v486, %v493
        %v495 = vcombine.low %v434, %v440
        %v497 = vunpack.c.l.s4 1983009808
        %v498 = vunpack.c.0.s8 %v497
        %v499 = vlaneseq
        %v500 = vshrl.u32 %v499, 7
        %v501 = vsub.s32 %v498, %v500
        %v502 = vrot.slane %v495, %v501
        %vm503 = vcmask 1044484
        %v504 = vsel %vm503, %v469, %v469
        %vm505 = vcmask 1046534
        %v506 = vsel %vm505, %v469, %v504
        %v507 = vrot.slane %v494, 7
        %vm508 = vcmask 1041409
        %v509 = vsel %vm508, %v507, %v506
        %vm510 = vcmask 1043459
        %v511 = vsel %vm510, %v507, %v509
        %vm512 = vcmask 1045509
        %v513 = vsel %vm512, %v507, %v511
        %vm514 = vcmask 1047559
        %v515 = vsel %vm514, %v507, %v513
        %v516 = vsel %vm503, %v477, %v477
        %v517 = vsel %vm505, %v477, %v516
        %v518 = vrot.slane %v502, 7
        %v519 = vsel %vm508, %v518, %v517
        %v520 = vsel %vm510, %v518, %v519
        %v521 = vsel %vm512, %v518, %v520
        %v522 = vsel %vm514, %v518, %v521
        %v525 = vadd.f32 %v367, %v515
        %v526 = vadd.f32 %v368, %v522
        %527 = vst [vmem:[#allocation2] sm:$0xff] %v525
        %528 = vst [vmem:[#allocation2 + $0x8] sm:$0xf] %v526
        %p529 = scmp.eq.s32.totalorder %s25, 1
        // Predicated region
        $region84: #{tpu_custom_call.1} parent=58 // pred_check
          %p530 = pneg %p529
        $region85: #{tpu_custom_call.1} parent=58 // pred_check_branch
          %532 = sbr.rel (%p530) target = $region87
        $region86: #{tpu_custom_call.1} parent=58 // pred_region
          %v533 = vld [vmem:[#allocation2] sm:$0xff]
          %v534 = vld [vmem:[#allocation2 + $0x8] sm:$0xf]
          %v535 = vmul.f32 %v533, 0.083333336
          %v536 = vmul.f32 %v534, 0.083333336
          %v537 = vld [vmem:[#allocation4] sm:$0xff]
          %v538 = vld [vmem:[#allocation4 + $0x8] sm:$0xff]
          %v539 = vld [vmem:[#allocation4 + $0x10] sm:$0xff]
          %v540 = vld [vmem:[#allocation4 + $0x18] sm:$0xff]
          %v541 = vld [vmem:[#allocation4 + $0x20] sm:$0xff]
          %v542 = vld [vmem:[#allocation4 + $0x28] sm:$0xff]
          %v543 = vld [vmem:[#allocation4 + $0x30] sm:$0xff]
          %v544 = vld [vmem:[#allocation4 + $0x38] sm:$0xff]
          %v545 = vld [vmem:[#allocation4 + $0x40] sm:$0xff]
          %v546 = vld [vmem:[#allocation4 + $0x48] sm:$0xff]
          %v547 = vld [vmem:[#allocation4 + $0x50] sm:$0xff]
          %v548 = vld [vmem:[#allocation4 + $0x58] sm:$0xff]
          %v549 = vld [vmem:[#allocation4 + $0x60] sm:$0xff]
          %v550 = vld [vmem:[#allocation4 + $0x68] sm:$0xff]
          %v551 = vld [vmem:[#allocation4 + $0x70] sm:$0xff]
          %v552 = vld [vmem:[#allocation4 + $0x78] sm:$0xff]
          %v553 = vld [vmem:[#allocation4 + $0x80] sm:$0xff]
          %v554 = vld [vmem:[#allocation4 + $0x88] sm:$0xff]
          %v555 = vld [vmem:[#allocation4 + $0x90] sm:$0xff]
          %v556 = vld [vmem:[#allocation4 + $0x98] sm:$0xff]
          %v557 = vld [vmem:[#allocation4 + $0xa0] sm:$0xff]
          %v558 = vld [vmem:[#allocation4 + $0xa8] sm:$0xff]
          %v559 = vld [vmem:[#allocation4 + $0xb0] sm:$0xff]
          %v560 = vld [vmem:[#allocation4 + $0xb8] sm:$0xff]
          %v561 = vld [vmem:[#allocation4 + $0xc0] sm:$0xff]
          %v562 = vld [vmem:[#allocation4 + $0xc8] sm:$0xff]
          %v563 = vld [vmem:[#allocation4 + $0xd0] sm:$0xff]
          %v564 = vld [vmem:[#allocation4 + $0xd8] sm:$0xff]
          %v565 = vld [vmem:[#allocation4 + $0xe0] sm:$0xff]
          %v566 = vld [vmem:[#allocation4 + $0xe8] sm:$0xff]
          %v567 = vld [vmem:[#allocation4 + $0xf0] sm:$0xff]
          %v568 = vld [vmem:[#allocation4 + $0xf8] sm:$0xff]
          %v569 = vld [vmem:[#allocation4 + $0x100] sm:$0xff]
          %v570 = vld [vmem:[#allocation4 + $0x108] sm:$0xff]
          %v571 = vld [vmem:[#allocation4 + $0x110] sm:$0xff]
          %v572 = vld [vmem:[#allocation4 + $0x118] sm:$0xff]
          %v573 = vld [vmem:[#allocation4 + $0x120] sm:$0xff]
          %v574 = vld [vmem:[#allocation4 + $0x128] sm:$0xff]
          %v575 = vld [vmem:[#allocation4 + $0x130] sm:$0xff]
          %v576 = vld [vmem:[#allocation4 + $0x138] sm:$0xff]
          %v577 = vld [vmem:[#allocation4 + $0x140] sm:$0xff]
          %v578 = vld [vmem:[#allocation4 + $0x148] sm:$0xff]
          %v579 = vld [vmem:[#allocation4 + $0x150] sm:$0xff]
          %v580 = vld [vmem:[#allocation4 + $0x158] sm:$0xff]
          %v581 = vld [vmem:[#allocation4 + $0x160] sm:$0xff]
          %v582 = vld [vmem:[#allocation4 + $0x168] sm:$0xff]
          %v583 = vld [vmem:[#allocation4 + $0x170] sm:$0xff]
          %v584 = vld [vmem:[#allocation4 + $0x178] sm:$0xff]
          %v585 = vld [vmem:[#allocation4 + $0x180] sm:$0xff]
          %v586 = vld [vmem:[#allocation4 + $0x188] sm:$0xff]
          %v587 = vld [vmem:[#allocation4 + $0x190] sm:$0xff]
          %v588 = vld [vmem:[#allocation4 + $0x198] sm:$0xff]
          %v589 = vld [vmem:[#allocation4 + $0x1a0] sm:$0xff]
          %v590 = vld [vmem:[#allocation4 + $0x1a8] sm:$0xff]
          %v591 = vld [vmem:[#allocation4 + $0x1b0] sm:$0xff]
          %v592 = vld [vmem:[#allocation4 + $0x1b8] sm:$0xff]
          %v593 = vld [vmem:[#allocation4 + $0x1c0] sm:$0xff]
          %v594 = vld [vmem:[#allocation4 + $0x1c8] sm:$0xff]
          %v595 = vld [vmem:[#allocation4 + $0x1d0] sm:$0xff]
          %v596 = vld [vmem:[#allocation4 + $0x1d8] sm:$0xff]
          %v597 = vld [vmem:[#allocation4 + $0x1e0] sm:$0xff]
          %v598 = vld [vmem:[#allocation4 + $0x1e8] sm:$0xff]
          %v599 = vld [vmem:[#allocation4 + $0x1f0] sm:$0xff]
          %v600 = vld [vmem:[#allocation4 + $0x1f8] sm:$0xff]
          %v601 = vld [vmem:[#allocation4 + $0x200] sm:$0xff]
          %v602 = vld [vmem:[#allocation4 + $0x208] sm:$0xff]
          %v603 = vld [vmem:[#allocation4 + $0x210] sm:$0xff]
          %v604 = vld [vmem:[#allocation4 + $0x218] sm:$0xff]
          %v605 = vld [vmem:[#allocation4 + $0x220] sm:$0xff]
          %v606 = vld [vmem:[#allocation4 + $0x228] sm:$0xff]
          %v607 = vld [vmem:[#allocation4 + $0x230] sm:$0xff]
          %v608 = vld [vmem:[#allocation4 + $0x238] sm:$0xff]
          %v609 = vld [vmem:[#allocation4 + $0x240] sm:$0xff]
          %v610 = vld [vmem:[#allocation4 + $0x248] sm:$0xff]
          %v611 = vld [vmem:[#allocation4 + $0x250] sm:$0xff]
          %v612 = vld [vmem:[#allocation4 + $0x258] sm:$0xff]
          %v613 = vld [vmem:[#allocation4 + $0x260] sm:$0xff]
          %v614 = vld [vmem:[#allocation4 + $0x268] sm:$0xff]
          %v615 = vld [vmem:[#allocation4 + $0x270] sm:$0xff]
          %v616 = vld [vmem:[#allocation4 + $0x278] sm:$0xff]
          %v617 = vld [vmem:[#allocation4 + $0x280] sm:$0xff]
          %v618 = vld [vmem:[#allocation4 + $0x288] sm:$0xff]
          %v619 = vld [vmem:[#allocation4 + $0x290] sm:$0xff]
          %v620 = vld [vmem:[#allocation4 + $0x298] sm:$0xff]
          %v621 = vld [vmem:[#allocation4 + $0x2a0] sm:$0xff]
          %v622 = vld [vmem:[#allocation4 + $0x2a8] sm:$0xff]
          %v623 = vld [vmem:[#allocation4 + $0x2b0] sm:$0xff]
          %v624 = vld [vmem:[#allocation4 + $0x2b8] sm:$0xff]
          %v625 = vld [vmem:[#allocation4 + $0x2c0] sm:$0xff]
          %v626 = vld [vmem:[#allocation4 + $0x2c8] sm:$0xff]
          %v627 = vld [vmem:[#allocation4 + $0x2d0] sm:$0xff]
          %v628 = vld [vmem:[#allocation4 + $0x2d8] sm:$0xff]
          %v629 = vld [vmem:[#allocation4 + $0x2e0] sm:$0xff]
          %v630 = vld [vmem:[#allocation4 + $0x2e8] sm:$0xff]
          %v631 = vld [vmem:[#allocation4 + $0x2f0] sm:$0xff]
          %v632 = vld [vmem:[#allocation4 + $0x2f8] sm:$0xff]
          %v633 = vld [vmem:[#allocation4 + $0x300] sm:$0xff]
          %v634 = vld [vmem:[#allocation4 + $0x308] sm:$0xff]
          %v635 = vld [vmem:[#allocation4 + $0x310] sm:$0xff]
          %v636 = vld [vmem:[#allocation4 + $0x318] sm:$0xff]
          %v637 = vld [vmem:[#allocation4 + $0x320] sm:$0xff]
          %v638 = vld [vmem:[#allocation4 + $0x328] sm:$0xff]
          %v639 = vld [vmem:[#allocation4 + $0x330] sm:$0xff]
          %v640 = vld [vmem:[#allocation4 + $0x338] sm:$0xff]
          %v641 = vld [vmem:[#allocation4 + $0x340] sm:$0xff]
          %v642 = vld [vmem:[#allocation4 + $0x348] sm:$0xff]
          %v643 = vld [vmem:[#allocation4 + $0x350] sm:$0xff]
          %v644 = vld [vmem:[#allocation4 + $0x358] sm:$0xff]
          %v645 = vld [vmem:[#allocation4 + $0x360] sm:$0xff]
          %v646 = vld [vmem:[#allocation4 + $0x368] sm:$0xff]
          %v647 = vld [vmem:[#allocation4 + $0x370] sm:$0xff]
          %v648 = vld [vmem:[#allocation4 + $0x378] sm:$0xff]
          %v649 = vld [vmem:[#allocation4 + $0x380] sm:$0xff]
          %v650 = vld [vmem:[#allocation4 + $0x388] sm:$0xff]
          %v651 = vld [vmem:[#allocation4 + $0x390] sm:$0xff]
          %v652 = vld [vmem:[#allocation4 + $0x398] sm:$0xff]
          %v653 = vld [vmem:[#allocation4 + $0x3a0] sm:$0xff]
          %v654 = vld [vmem:[#allocation4 + $0x3a8] sm:$0xff]
          %v655 = vld [vmem:[#allocation4 + $0x3b0] sm:$0xff]
          %v656 = vld [vmem:[#allocation4 + $0x3b8] sm:$0xff]
          %v657 = vld [vmem:[#allocation4 + $0x3c0] sm:$0xff]
          %v658 = vld [vmem:[#allocation4 + $0x3c8] sm:$0xff]
          %v659 = vld [vmem:[#allocation4 + $0x3d0] sm:$0xff]
          %v660 = vld [vmem:[#allocation4 + $0x3d8] sm:$0xff]
          %v661 = vld [vmem:[#allocation4 + $0x3e0] sm:$0xff]
          %v662 = vld [vmem:[#allocation4 + $0x3e8] sm:$0xff]
          %v663 = vld [vmem:[#allocation4 + $0x3f0] sm:$0xff]
          %v664 = vld [vmem:[#allocation4 + $0x3f8] sm:$0xff]
          %v665 = vld [vmem:[#allocation4 + $0x400] sm:$0xff]
          %v666 = vld [vmem:[#allocation4 + $0x408] sm:$0xff]
          %v667 = vld [vmem:[#allocation4 + $0x410] sm:$0xff]
          %v668 = vld [vmem:[#allocation4 + $0x418] sm:$0xff]
          %v669 = vld [vmem:[#allocation4 + $0x420] sm:$0xff]
          %v670 = vld [vmem:[#allocation4 + $0x428] sm:$0xff]
          %v671 = vld [vmem:[#allocation4 + $0x430] sm:$0xff]
          %v672 = vld [vmem:[#allocation4 + $0x438] sm:$0xff]
          %v673 = vld [vmem:[#allocation4 + $0x440] sm:$0xff]
          %v674 = vld [vmem:[#allocation4 + $0x448] sm:$0xff]
          %v675 = vld [vmem:[#allocation4 + $0x450] sm:$0xff]
          %v676 = vld [vmem:[#allocation4 + $0x458] sm:$0xff]
          %v677 = vld [vmem:[#allocation4 + $0x460] sm:$0xff]
          %v678 = vld [vmem:[#allocation4 + $0x468] sm:$0xff]
          %v679 = vld [vmem:[#allocation4 + $0x470] sm:$0xff]
          %v680 = vld [vmem:[#allocation4 + $0x478] sm:$0xff]
          %v681 = vld [vmem:[#allocation4 + $0x480] sm:$0xff]
          %v682 = vld [vmem:[#allocation4 + $0x488] sm:$0xff]
          %v683 = vld [vmem:[#allocation4 + $0x490] sm:$0xff]
          %v684 = vld [vmem:[#allocation4 + $0x498] sm:$0xff]
          %v685 = vld [vmem:[#allocation4 + $0x4a0] sm:$0xff]
          %v686 = vld [vmem:[#allocation4 + $0x4a8] sm:$0xff]
          %v687 = vld [vmem:[#allocation4 + $0x4b0] sm:$0xff]
          %v688 = vld [vmem:[#allocation4 + $0x4b8] sm:$0xff]
          %v689 = vld [vmem:[#allocation4 + $0x4c0] sm:$0xff]
          %v690 = vld [vmem:[#allocation4 + $0x4c8] sm:$0xff]
          %v691 = vld [vmem:[#allocation4 + $0x4d0] sm:$0xff]
          %v692 = vld [vmem:[#allocation4 + $0x4d8] sm:$0xff]
          %v693 = vld [vmem:[#allocation4 + $0x4e0] sm:$0xff]
          %v694 = vld [vmem:[#allocation4 + $0x4e8] sm:$0xff]
          %v695 = vld [vmem:[#allocation4 + $0x4f0] sm:$0xff]
          %v696 = vld [vmem:[#allocation4 + $0x4f8] sm:$0xff]
          %v697 = vld [vmem:[#allocation4 + $0x500] sm:$0xff]
          %v698 = vld [vmem:[#allocation4 + $0x508] sm:$0xff]
          %v699 = vld [vmem:[#allocation4 + $0x510] sm:$0xff]
          %v700 = vld [vmem:[#allocation4 + $0x518] sm:$0xff]
          %v701 = vld [vmem:[#allocation4 + $0x520] sm:$0xff]
          %v702 = vld [vmem:[#allocation4 + $0x528] sm:$0xff]
          %v703 = vld [vmem:[#allocation4 + $0x530] sm:$0xff]
          %v704 = vld [vmem:[#allocation4 + $0x538] sm:$0xff]
          %v705 = vld [vmem:[#allocation4 + $0x540] sm:$0xff]
          %v706 = vld [vmem:[#allocation4 + $0x548] sm:$0xff]
          %v707 = vld [vmem:[#allocation4 + $0x550] sm:$0xff]
          %v708 = vld [vmem:[#allocation4 + $0x558] sm:$0xff]
          %v709 = vld [vmem:[#allocation4 + $0x560] sm:$0xff]
          %v710 = vld [vmem:[#allocation4 + $0x568] sm:$0xff]
          %v711 = vld [vmem:[#allocation4 + $0x570] sm:$0xff]
          %v712 = vld [vmem:[#allocation4 + $0x578] sm:$0xff]
          %v713 = vld [vmem:[#allocation4 + $0x580] sm:$0xff]
          %v714 = vld [vmem:[#allocation4 + $0x588] sm:$0xff]
          %v715 = vld [vmem:[#allocation4 + $0x590] sm:$0xff]
          %v716 = vld [vmem:[#allocation4 + $0x598] sm:$0xff]
          %v717 = vld [vmem:[#allocation4 + $0x5a0] sm:$0xff]
          %v718 = vld [vmem:[#allocation4 + $0x5a8] sm:$0xff]
          %v719 = vld [vmem:[#allocation4 + $0x5b0] sm:$0xff]
          %v720 = vld [vmem:[#allocation4 + $0x5b8] sm:$0xff]
          %v721 = vld [vmem:[#allocation4 + $0x5c0] sm:$0xff]
          %v722 = vld [vmem:[#allocation4 + $0x5c8] sm:$0xff]
          %v723 = vld [vmem:[#allocation4 + $0x5d0] sm:$0xff]
          %v724 = vld [vmem:[#allocation4 + $0x5d8] sm:$0xff]
          %v725 = vld [vmem:[#allocation4 + $0x5e0] sm:$0xff]
          %v726 = vld [vmem:[#allocation4 + $0x5e8] sm:$0xff]
          %v727 = vld [vmem:[#allocation4 + $0x5f0] sm:$0xff]
          %v728 = vld [vmem:[#allocation4 + $0x5f8] sm:$0xff]
          %v729 = vld [vmem:[#allocation4 + $0x600] sm:$0xff]
          %v730 = vld [vmem:[#allocation4 + $0x608] sm:$0xff]
          %v731 = vld [vmem:[#allocation4 + $0x610] sm:$0xff]
          %v732 = vld [vmem:[#allocation4 + $0x618] sm:$0xff]
          %v733 = vld [vmem:[#allocation4 + $0x620] sm:$0xff]
          %v734 = vld [vmem:[#allocation4 + $0x628] sm:$0xff]
          %v735 = vld [vmem:[#allocation4 + $0x630] sm:$0xff]
          %v736 = vld [vmem:[#allocation4 + $0x638] sm:$0xff]
          %v737 = vld [vmem:[#allocation4 + $0x640] sm:$0xff]
          %v738 = vld [vmem:[#allocation4 + $0x648] sm:$0xff]
          %v739 = vld [vmem:[#allocation4 + $0x650] sm:$0xff]
          %v740 = vld [vmem:[#allocation4 + $0x658] sm:$0xff]
          %v741 = vld [vmem:[#allocation4 + $0x660] sm:$0xff]
          %v742 = vld [vmem:[#allocation4 + $0x668] sm:$0xff]
          %v743 = vld [vmem:[#allocation4 + $0x670] sm:$0xff]
          %v744 = vld [vmem:[#allocation4 + $0x678] sm:$0xff]
          %v745 = vld [vmem:[#allocation4 + $0x680] sm:$0xff]
          %v746 = vld [vmem:[#allocation4 + $0x688] sm:$0xff]
          %v747 = vld [vmem:[#allocation4 + $0x690] sm:$0xff]
          %v748 = vld [vmem:[#allocation4 + $0x698] sm:$0xff]
          %v749 = vld [vmem:[#allocation4 + $0x6a0] sm:$0xff]
          %v750 = vld [vmem:[#allocation4 + $0x6a8] sm:$0xff]
          %v751 = vld [vmem:[#allocation4 + $0x6b0] sm:$0xff]
          %v752 = vld [vmem:[#allocation4 + $0x6b8] sm:$0xff]
          %v753 = vld [vmem:[#allocation4 + $0x6c0] sm:$0xff]
          %v754 = vld [vmem:[#allocation4 + $0x6c8] sm:$0xff]
          %v755 = vld [vmem:[#allocation4 + $0x6d0] sm:$0xff]
          %v756 = vld [vmem:[#allocation4 + $0x6d8] sm:$0xff]
          %v757 = vld [vmem:[#allocation4 + $0x6e0] sm:$0xff]
          %v758 = vld [vmem:[#allocation4 + $0x6e8] sm:$0xff]
          %v759 = vld [vmem:[#allocation4 + $0x6f0] sm:$0xff]
          %v760 = vld [vmem:[#allocation4 + $0x6f8] sm:$0xff]
          %v761 = vld [vmem:[#allocation4 + $0x700] sm:$0xff]
          %v762 = vld [vmem:[#allocation4 + $0x708] sm:$0xff]
          %v763 = vld [vmem:[#allocation4 + $0x710] sm:$0xff]
          %v764 = vld [vmem:[#allocation4 + $0x718] sm:$0xff]
          %v765 = vld [vmem:[#allocation4 + $0x720] sm:$0xff]
          %v766 = vld [vmem:[#allocation4 + $0x728] sm:$0xff]
          %v767 = vld [vmem:[#allocation4 + $0x730] sm:$0xff]
          %v768 = vld [vmem:[#allocation4 + $0x738] sm:$0xff]
          %v769 = vld [vmem:[#allocation4 + $0x740] sm:$0xff]
          %v770 = vld [vmem:[#allocation4 + $0x748] sm:$0xff]
          %v771 = vld [vmem:[#allocation4 + $0x750] sm:$0xff]
          %v772 = vld [vmem:[#allocation4 + $0x758] sm:$0xff]
          %v773 = vld [vmem:[#allocation4 + $0x760] sm:$0xff]
          %v774 = vld [vmem:[#allocation4 + $0x768] sm:$0xff]
          %v775 = vld [vmem:[#allocation4 + $0x770] sm:$0xff]
          %v776 = vld [vmem:[#allocation4 + $0x778] sm:$0xff]
          %v777 = vld [vmem:[#allocation4 + $0x780] sm:$0xff]
          %v778 = vld [vmem:[#allocation4 + $0x788] sm:$0xff]
          %v779 = vld [vmem:[#allocation4 + $0x790] sm:$0xff]
          %v780 = vld [vmem:[#allocation4 + $0x798] sm:$0xff]
          %v781 = vld [vmem:[#allocation4 + $0x7a0] sm:$0xff]
          %v782 = vld [vmem:[#allocation4 + $0x7a8] sm:$0xff]
          %v783 = vld [vmem:[#allocation4 + $0x7b0] sm:$0xff]
          %v784 = vld [vmem:[#allocation4 + $0x7b8] sm:$0xff]
          %v785 = vld [vmem:[#allocation4 + $0x7c0] sm:$0xff]
          %v786 = vld [vmem:[#allocation4 + $0x7c8] sm:$0xff]
          %v787 = vld [vmem:[#allocation4 + $0x7d0] sm:$0xff]
          %v788 = vld [vmem:[#allocation4 + $0x7d8] sm:$0xff]
          %v789 = vld [vmem:[#allocation4 + $0x7e0] sm:$0xff]
          %v790 = vld [vmem:[#allocation4 + $0x7e8] sm:$0xff]
          %v791 = vld [vmem:[#allocation4 + $0x7f0] sm:$0xff]
          %v792 = vld [vmem:[#allocation4 + $0x7f8] sm:$0xff]
          %v793 = vld [vmem:[#allocation4 + $0x800] sm:$0xff]
          %v794 = vld [vmem:[#allocation4 + $0x808] sm:$0xff]
          %v795 = vld [vmem:[#allocation4 + $0x810] sm:$0xff]
          %v796 = vld [vmem:[#allocation4 + $0x818] sm:$0xff]
          %v797 = vld [vmem:[#allocation4 + $0x820] sm:$0xff]
          %v798 = vld [vmem:[#allocation4 + $0x828] sm:$0xff]
          %v799 = vld [vmem:[#allocation4 + $0x830] sm:$0xff]
          %v800 = vld [vmem:[#allocation4 + $0x838] sm:$0xff]
          %v801 = vld [vmem:[#allocation4 + $0x840] sm:$0xff]
          %v802 = vld [vmem:[#allocation4 + $0x848] sm:$0xff]
          %v803 = vld [vmem:[#allocation4 + $0x850] sm:$0xff]
          %v804 = vld [vmem:[#allocation4 + $0x858] sm:$0xff]
          %v805 = vld [vmem:[#allocation4 + $0x860] sm:$0xff]
          %v806 = vld [vmem:[#allocation4 + $0x868] sm:$0xff]
          %v807 = vld [vmem:[#allocation4 + $0x870] sm:$0xff]
          %v808 = vld [vmem:[#allocation4 + $0x878] sm:$0xff]
          %v809 = vld [vmem:[#allocation4 + $0x880] sm:$0xff]
          %v810 = vld [vmem:[#allocation4 + $0x888] sm:$0xff]
          %v811 = vld [vmem:[#allocation4 + $0x890] sm:$0xff]
          %v812 = vld [vmem:[#allocation4 + $0x898] sm:$0xff]
          %v813 = vld [vmem:[#allocation4 + $0x8a0] sm:$0xff]
          %v814 = vld [vmem:[#allocation4 + $0x8a8] sm:$0xff]
          %v815 = vld [vmem:[#allocation4 + $0x8b0] sm:$0xff]
          %v816 = vld [vmem:[#allocation4 + $0x8b8] sm:$0xff]
          %v817 = vld [vmem:[#allocation4 + $0x8c0] sm:$0xff]
          %v818 = vld [vmem:[#allocation4 + $0x8c8] sm:$0xff]
          %v819 = vld [vmem:[#allocation4 + $0x8d0] sm:$0xff]
          %v820 = vld [vmem:[#allocation4 + $0x8d8] sm:$0xff]
          %v821 = vld [vmem:[#allocation4 + $0x8e0] sm:$0xff]
          %v822 = vld [vmem:[#allocation4 + $0x8e8] sm:$0xff]
          %v823 = vld [vmem:[#allocation4 + $0x8f0] sm:$0xff]
          %v824 = vld [vmem:[#allocation4 + $0x8f8] sm:$0xff]
          %v825 = vld [vmem:[#allocation7] sm:$0x7]
          %v827 = vlaneseq
          %v828 = vshrl.u32 %v827, 7
          %v829 = vsub.s32 0, %v828
          %v830 = vrot.slane %v825, %v829
          %v831 = vlaneseq
          %v832 = vshrl.u32 %v831, 7
          %v833 = vsub.s32 1, %v832
          %v834 = vrot.slane %v825, %v833
          %v835 = vlaneseq
          %v836 = vshrl.u32 %v835, 7
          %v837 = vsub.s32 2, %v836
          %v838 = vrot.slane %v825, %v837
          %v844 = vcombine.high %v535, %v535
          %v846 = vunpack.c.l.s4 1983009808
          %v847 = vunpack.c.0.s8 %v846
          %v848 = vlaneseq
          %v849 = vshrl.u32 %v848, 7
          %v850 = vsub.s32 %v847, %v849
          %v851 = vrot.slane %v535, %v850
          %v853 = vunpack.c.l.s4 1983009808
          %v854 = vunpack.c.0.s8 %v853
          %v855 = vlaneseq
          %v856 = vshrl.u32 %v855, 7
          %v857 = vsub.s32 %v854, %v856
          %v858 = vrot.slane %v844, %v857
          %v859 = vcombine.high %v851, %v851
          %v860 = vcombine.high %v858, %v858
          %v862 = vunpack.c.l.s4 1983009808
          %v863 = vunpack.c.0.s8 %v862
          %v864 = vlaneseq
          %v865 = vshrl.u32 %v864, 7
          %v866 = vsub.s32 %v863, %v865
          %v867 = vrot.slane %v536, %v866
          %v868 = vcombine.high %v867, %v867
          %875 = vmatprep.subr.mxu0 %v538
          %876 = vmatpush1.msra.mxu0 %v537
          %877 = vmatprep.subr.mxu0 %v541
          %878 = vmatpush1.msra.mxu0 %v540
          %879 = vmatprep.subr.mxu0 %v544
          %880 = vmatpush1.msra.mxu0 %v543
          %881 = vmatprep.subr.mxu0 %v547
          %882 = vmatpush1.msra.mxu0 %v546
          %883 = vmatprep.subr.mxu0 %v550
          %884 = vmatpush1.msra.mxu0 %v549
          %885 = vmatprep.subr.mxu0 %v553
          %886 = vmatpush1.msra.mxu0 %v552
          %887 = vmatprep.subr.mxu0 %v556
          %888 = vmatpush1.msra.mxu0 %v555
          %889 = vmatprep.subr.mxu0 %v559
          %890 = vmatpush1.msra.mxu0 %v558
          %891 = vmatprep.subr.mxu0 %v562
          %892 = vmatpush1.msra.mxu0 %v561
          %893 = vmatprep.subr.mxu0 %v565
          %894 = vmatpush1.msra.mxu0 %v564
          %895 = vmatprep.subr.mxu0 %v568
          %896 = vmatpush1.msra.mxu0 %v567
          %897 = vmatprep.subr.mxu0 %v571
          %898 = vmatpush1.msra.mxu0 %v570
          %899 = vmatprep.subr.mxu0 %v574
          %900 = vmatpush1.msra.mxu0 %v573
          %901 = vmatprep.subr.mxu0 %v577
          %902 = vmatpush1.msra.mxu0 %v576
          %903 = vmatprep.subr.mxu0 %v580
          %904 = vmatpush1.msra.mxu0 %v579
          %905 = vmatprep.subr.mxu0 %v583
          %906 = vmatpush1.msra.mxu0 %v582
          %907 = vmatprep.subr.mxu0 %v586
          %908 = vmatpush1.msra.mxu0 %v585
          %909 = vmatprep.subr.mxu0 %v589
          %910 = vmatpush1.msra.mxu0 %v588
          %911 = vmatprep.subr.mxu0 %v592
          %912 = vmatpush1.msra.mxu0 %v591
          %913 = vmatprep.subr.mxu0 %v595
          %914 = vmatpush1.msra.mxu0 %v594
          %915 = vmatprep.subr.mxu0 %v598
          %916 = vmatpush1.msra.mxu0 %v597
          %917 = vmatprep.subr.mxu0 %v601
          %918 = vmatpush1.msra.mxu0 %v600
          %919 = vmatprep.subr.mxu0 %v604
          %920 = vmatpush1.msra.mxu0 %v603
          %921 = vmatprep.subr.mxu0 %v607
          %922 = vmatpush1.msra.mxu0 %v606
          %923 = vmatprep.subr.mxu0 %v610
          %924 = vmatpush1.msra.mxu0 %v609
          %925 = vmatprep.subr.mxu0 %v613
          %926 = vmatpush1.msra.mxu0 %v612
          %927 = vmatprep.subr.mxu0 %v616
          %928 = vmatpush1.msra.mxu0 %v615
          %929 = vmatprep.subr.mxu0 %v619
          %930 = vmatpush1.msra.mxu0 %v618
          %931 = vmatprep.subr.mxu0 %v622
          %932 = vmatpush1.msra.mxu0 %v621
          %933 = vmatprep.subr.mxu0 %v625
          %934 = vmatpush1.msra.mxu0 %v624
          %935 = vmatprep.subr.mxu0 %v628
          %936 = vmatpush1.msra.mxu0 %v627
          %937 = vmatprep.subr.mxu0 %v631
          %938 = vmatpush1.msra.mxu0 %v630
          %939 = vmatprep.mubr.f32.mxu0 %v859
          %940 = vmatmul.mubr.f32.gmra.mrb[0].mxu0 %v851
          %v941 = vpop.f32.mrb[0].mxu0
          %v942 = vadd.f32 %v830, %v941
          %v943 = vpop.f32.mrb[0].mxu0
          %v944 = vadd.f32 %v834, %v943
          %945 = vdwg.mxu0
          %946 = vmatprep.subr.mxu0 %v634
          %947 = vmatpush1.msra.mxu0 %v633
          %948 = vmatprep.subr.mxu0 %v637
          %949 = vmatpush1.msra.mxu0 %v636
          %950 = vmatprep.subr.mxu0 %v640
          %951 = vmatpush1.msra.mxu0 %v639
          %952 = vmatprep.subr.mxu0 %v643
          %953 = vmatpush1.msra.mxu0 %v642
          %954 = vmatprep.subr.mxu0 %v646
          %955 = vmatpush1.msra.mxu0 %v645
          %956 = vmatprep.subr.mxu0 %v649
          %957 = vmatpush1.msra.mxu0 %v648
          %958 = vmatprep.subr.mxu0 %v652
          %959 = vmatpush1.msra.mxu0 %v651
          %960 = vmatprep.subr.mxu0 %v655
          %961 = vmatpush1.msra.mxu0 %v654
          %962 = vmatprep.subr.mxu0 %v658
          %963 = vmatpush1.msra.mxu0 %v657
          %964 = vmatprep.subr.mxu0 %v661
          %965 = vmatpush1.msra.mxu0 %v660
          %966 = vmatprep.subr.mxu0 %v664
          %967 = vmatpush1.msra.mxu0 %v663
          %968 = vmatprep.subr.mxu0 %v667
          %969 = vmatpush1.msra.mxu0 %v666
          %970 = vmatprep.subr.mxu0 %v670
          %971 = vmatpush1.msra.mxu0 %v669
          %972 = vmatprep.subr.mxu0 %v673
          %973 = vmatpush1.msra.mxu0 %v672
          %974 = vmatprep.subr.mxu0 %v676
          %975 = vmatpush1.msra.mxu0 %v675
          %976 = vmatprep.subr.mxu0 %v679
          %977 = vmatpush1.msra.mxu0 %v678
          %978 = vmatprep.subr.mxu0 %v682
          %979 = vmatpush1.msra.mxu0 %v681
          %980 = vmatprep.subr.mxu0 %v685
          %981 = vmatpush1.msra.mxu0 %v684
          %982 = vmatprep.subr.mxu0 %v688
          %983 = vmatpush1.msra.mxu0 %v687
          %984 = vmatprep.subr.mxu0 %v691
          %985 = vmatpush1.msra.mxu0 %v690
          %986 = vmatprep.subr.mxu0 %v694
          %987 = vmatpush1.msra.mxu0 %v693
          %988 = vmatprep.subr.mxu0 %v697
          %989 = vmatpush1.msra.mxu0 %v696
          %990 = vmatprep.subr.mxu0 %v700
          %991 = vmatpush1.msra.mxu0 %v699
          %992 = vmatprep.subr.mxu0 %v703
          %993 = vmatpush1.msra.mxu0 %v702
          %994 = vmatprep.subr.mxu0 %v706
          %995 = vmatpush1.msra.mxu0 %v705
          %996 = vmatprep.subr.mxu0 %v709
          %997 = vmatpush1.msra.mxu0 %v708
          %998 = vmatprep.subr.mxu0 %v712
          %999 = vmatpush1.msra.mxu0 %v711
          %1000 = vmatprep.subr.mxu0 %v715
          %1001 = vmatpush1.msra.mxu0 %v714
          %1002 = vmatprep.subr.mxu0 %v718
          %1003 = vmatpush1.msra.mxu0 %v717
          %1004 = vmatprep.subr.mxu0 %v721
          %1005 = vmatpush1.msra.mxu0 %v720
          %1006 = vmatprep.subr.mxu0 %v724
          %1007 = vmatpush1.msra.mxu0 %v723
          %1008 = vmatprep.subr.mxu0 %v727
          %1009 = vmatpush1.msra.mxu0 %v726
          %1010 = vmatprep.mubr.f32.mxu0 %v860
          %1011 = vmatmul.mubr.f32.gmra.mrb[0].mxu0 %v858
          %v1012 = vpop.f32.mrb[0].mxu0
          %v1013 = vadd.f32 %v942, %v1012
          %v1014 = vpop.f32.mrb[0].mxu0
          %v1015 = vadd.f32 %v944, %v1014
          %1016 = vdwg.mxu0
          %1017 = vmatprep.subr.mxu0 %v730
          %1018 = vmatpush1.msra.mxu0 %v729
          %1019 = vmatprep.subr.mxu0 %v733
          %1020 = vmatpush1.msra.mxu0 %v732
          %1021 = vmatprep.subr.mxu0 %v736
          %1022 = vmatpush1.msra.mxu0 %v735
          %1023 = vmatprep.subr.mxu0 %v739
          %1024 = vmatpush1.msra.mxu0 %v738
          %1025 = vmatprep.subr.mxu0 %v742
          %1026 = vmatpush1.msra.mxu0 %v741
          %1027 = vmatprep.subr.mxu0 %v745
          %1028 = vmatpush1.msra.mxu0 %v744
          %1029 = vmatprep.subr.mxu0 %v748
          %1030 = vmatpush1.msra.mxu0 %v747
          %1031 = vmatprep.subr.mxu0 %v751
          %1032 = vmatpush1.msra.mxu0 %v750
          %1033 = vmatprep.subr.mxu0 %v754
          %1034 = vmatpush1.msra.mxu0 %v753
          %1035 = vmatprep.subr.mxu0 %v757
          %1036 = vmatpush1.msra.mxu0 %v756
          %1037 = vmatprep.subr.mxu0 %v760
          %1038 = vmatpush1.msra.mxu0 %v759
          %1039 = vmatprep.subr.mxu0 %v763
          %1040 = vmatpush1.msra.mxu0 %v762
          %1041 = vmatprep.subr.mxu0 %v766
          %1042 = vmatpush1.msra.mxu0 %v765
          %1043 = vmatprep.subr.mxu0 %v769
          %1044 = vmatpush1.msra.mxu0 %v768
          %1045 = vmatprep.subr.mxu0 %v772
          %1046 = vmatpush1.msra.mxu0 %v771
          %1047 = vmatprep.subr.mxu0 %v775
          %1048 = vmatpush1.msra.mxu0 %v774
          %1049 = vmatprep.subr.mxu0 %v778
          %1050 = vmatpush1.msra.mxu0 %v777
          %1051 = vmatprep.subr.mxu0 %v781
          %1052 = vmatpush1.msra.mxu0 %v780
          %1053 = vmatprep.subr.mxu0 %v784
          %1054 = vmatpush1.msra.mxu0 %v783
          %1055 = vmatprep.subr.mxu0 %v787
          %1056 = vmatpush1.msra.mxu0 %v786
          %1057 = vmatprep.subr.mxu0 %v790
          %1058 = vmatpush1.msra.mxu0 %v789
          %1059 = vmatprep.subr.mxu0 %v793
          %1060 = vmatpush1.msra.mxu0 %v792
          %1061 = vmatprep.subr.mxu0 %v796
          %1062 = vmatpush1.msra.mxu0 %v795
          %1063 = vmatprep.subr.mxu0 %v799
          %1064 = vmatpush1.msra.mxu0 %v798
          %1065 = vmatprep.subr.mxu0 %v802
          %1066 = vmatpush1.msra.mxu0 %v801
          %1067 = vmatprep.subr.mxu0 %v805
          %1068 = vmatpush1.msra.mxu0 %v804
          %1069 = vmatprep.subr.mxu0 %v808
          %1070 = vmatpush1.msra.mxu0 %v807
          %1071 = vmatprep.subr.mxu0 %v811
          %1072 = vmatpush1.msra.mxu0 %v810
          %1073 = vmatprep.subr.mxu0 %v814
          %1074 = vmatpush1.msra.mxu0 %v813
          %1075 = vmatprep.subr.mxu0 %v817
          %1076 = vmatpush1.msra.mxu0 %v816
          %1077 = vmatprep.subr.mxu0 %v820
          %1078 = vmatpush1.msra.mxu0 %v819
          %1079 = vmatprep.subr.mxu0 %v823
          %1080 = vmatpush1.msra.mxu0 %v822
          %1081 = vmatprep.mubr.f32.mxu0 %v868
          %1082 = vmatmul.mubr.f32.gmra.mrb[0].mxu0 %v867
          %v1083 = vpop.f32.mrb[0].mxu0
          %v1084 = vadd.f32 %v1013, %v1083
          %v1085 = vpop.f32.mrb[0].mxu0
          %v1086 = vadd.f32 %v1015, %v1085
          %1087 = vdwg.mxu0
          %1088 = vmatprep.subr.mxu0 0.0
          %1089 = vmatpush1.msra.mxu0 %v539
          %1090 = vmatprep.subr.mxu0 0.0
          %1091 = vmatpush1.msra.mxu0 %v542
          %1092 = vmatprep.subr.mxu0 0.0
          %1093 = vmatpush1.msra.mxu0 %v545
          %1094 = vmatprep.subr.mxu0 0.0
          %1095 = vmatpush1.msra.mxu0 %v548
          %1096 = vmatprep.subr.mxu0 0.0
          %1097 = vmatpush1.msra.mxu0 %v551
          %1098 = vmatprep.subr.mxu0 0.0
          %1099 = vmatpush1.msra.mxu0 %v554
          %1100 = vmatprep.subr.mxu0 0.0
          %1101 = vmatpush1.msra.mxu0 %v557
          %1102 = vmatprep.subr.mxu0 0.0
          %1103 = vmatpush1.msra.mxu0 %v560
          %1104 = vmatprep.subr.mxu0 0.0
          %1105 = vmatpush1.msra.mxu0 %v563
          %1106 = vmatprep.subr.mxu0 0.0
          %1107 = vmatpush1.msra.mxu0 %v566
          %1108 = vmatprep.subr.mxu0 0.0
          %1109 = vmatpush1.msra.mxu0 %v569
          %1110 = vmatprep.subr.mxu0 0.0
          %1111 = vmatpush1.msra.mxu0 %v572
          %1112 = vmatprep.subr.mxu0 0.0
          %1113 = vmatpush1.msra.mxu0 %v575
          %1114 = vmatprep.subr.mxu0 0.0
          %1115 = vmatpush1.msra.mxu0 %v578
          %1116 = vmatprep.subr.mxu0 0.0
          %1117 = vmatpush1.msra.mxu0 %v581
          %1118 = vmatprep.subr.mxu0 0.0
          %1119 = vmatpush1.msra.mxu0 %v584
          %1120 = vmatprep.subr.mxu0 0.0
          %1121 = vmatpush1.msra.mxu0 %v587
          %1122 = vmatprep.subr.mxu0 0.0
          %1123 = vmatpush1.msra.mxu0 %v590
          %1124 = vmatprep.subr.mxu0 0.0
          %1125 = vmatpush1.msra.mxu0 %v593
          %1126 = vmatprep.subr.mxu0 0.0
          %1127 = vmatpush1.msra.mxu0 %v596
          %1128 = vmatprep.subr.mxu0 0.0
          %1129 = vmatpush1.msra.mxu0 %v599
          %1130 = vmatprep.subr.mxu0 0.0
          %1131 = vmatpush1.msra.mxu0 %v602
          %1132 = vmatprep.subr.mxu0 0.0
          %1133 = vmatpush1.msra.mxu0 %v605
          %1134 = vmatprep.subr.mxu0 0.0
          %1135 = vmatpush1.msra.mxu0 %v608
          %1136 = vmatprep.subr.mxu0 0.0
          %1137 = vmatpush1.msra.mxu0 %v611
          %1138 = vmatprep.subr.mxu0 0.0
          %1139 = vmatpush1.msra.mxu0 %v614
          %1140 = vmatprep.subr.mxu0 0.0
          %1141 = vmatpush1.msra.mxu0 %v617
          %1142 = vmatprep.subr.mxu0 0.0
          %1143 = vmatpush1.msra.mxu0 %v620
          %1144 = vmatprep.subr.mxu0 0.0
          %1145 = vmatpush1.msra.mxu0 %v623
          %1146 = vmatprep.subr.mxu0 0.0
          %1147 = vmatpush1.msra.mxu0 %v626
          %1148 = vmatprep.subr.mxu0 0.0
          %1149 = vmatpush1.msra.mxu0 %v629
          %1150 = vmatprep.subr.mxu0 0.0
          %1151 = vmatpush1.msra.mxu0 %v632
          %1152 = vmatprep.mubr.f32.mxu0 %v859
          %1153 = vmatmul.mubr.f32.gmra.mrb[0].mxu0 %v851
          %v1154 = vpop.f32.mrb[0].mxu0
          %v1155 = vadd.f32 %v838, %v1154
          %v1156 = vpop.f32.mrb[0].mxu0
          %1157 = vdwg.mxu0
          %1158 = vmatprep.subr.mxu0 0.0
          %1159 = vmatpush1.msra.mxu0 %v635
          %1160 = vmatprep.subr.mxu0 0.0
          %1161 = vmatpush1.msra.mxu0 %v638
          %1162 = vmatprep.subr.mxu0 0.0
          %1163 = vmatpush1.msra.mxu0 %v641
          %1164 = vmatprep.subr.mxu0 0.0
          %1165 = vmatpush1.msra.mxu0 %v644
          %1166 = vmatprep.subr.mxu0 0.0
          %1167 = vmatpush1.msra.mxu0 %v647
          %1168 = vmatprep.subr.mxu0 0.0
          %1169 = vmatpush1.msra.mxu0 %v650
          %1170 = vmatprep.subr.mxu0 0.0
          %1171 = vmatpush1.msra.mxu0 %v653
          %1172 = vmatprep.subr.mxu0 0.0
          %1173 = vmatpush1.msra.mxu0 %v656
          %1174 = vmatprep.subr.mxu0 0.0
          %1175 = vmatpush1.msra.mxu0 %v659
          %1176 = vmatprep.subr.mxu0 0.0
          %1177 = vmatpush1.msra.mxu0 %v662
          %1178 = vmatprep.subr.mxu0 0.0
          %1179 = vmatpush1.msra.mxu0 %v665
          %1180 = vmatprep.subr.mxu0 0.0
          %1181 = vmatpush1.msra.mxu0 %v668
          %1182 = vmatprep.subr.mxu0 0.0
          %1183 = vmatpush1.msra.mxu0 %v671
          %1184 = vmatprep.subr.mxu0 0.0
          %1185 = vmatpush1.msra.mxu0 %v674
          %1186 = vmatprep.subr.mxu0 0.0
          %1187 = vmatpush1.msra.mxu0 %v677
          %1188 = vmatprep.subr.mxu0 0.0
          %1189 = vmatpush1.msra.mxu0 %v680
          %1190 = vmatprep.subr.mxu0 0.0
          %1191 = vmatpush1.msra.mxu0 %v683
          %1192 = vmatprep.subr.mxu0 0.0
          %1193 = vmatpush1.msra.mxu0 %v686
          %1194 = vmatprep.subr.mxu0 0.0
          %1195 = vmatpush1.msra.mxu0 %v689
          %1196 = vmatprep.subr.mxu0 0.0
          %1197 = vmatpush1.msra.mxu0 %v692
          %1198 = vmatprep.subr.mxu0 0.0
          %1199 = vmatpush1.msra.mxu0 %v695
          %1200 = vmatprep.subr.mxu0 0.0
          %1201 = vmatpush1.msra.mxu0 %v698
          %1202 = vmatprep.subr.mxu0 0.0
          %1203 = vmatpush1.msra.mxu0 %v701
          %1204 = vmatprep.subr.mxu0 0.0
          %1205 = vmatpush1.msra.mxu0 %v704
          %1206 = vmatprep.subr.mxu0 0.0
          %1207 = vmatpush1.msra.mxu0 %v707
          %1208 = vmatprep.subr.mxu0 0.0
          %1209 = vmatpush1.msra.mxu0 %v710
          %1210 = vmatprep.subr.mxu0 0.0
          %1211 = vmatpush1.msra.mxu0 %v713
          %1212 = vmatprep.subr.mxu0 0.0
          %1213 = vmatpush1.msra.mxu0 %v716
          %1214 = vmatprep.subr.mxu0 0.0
          %1215 = vmatpush1.msra.mxu0 %v719
          %1216 = vmatprep.subr.mxu0 0.0
          %1217 = vmatpush1.msra.mxu0 %v722
          %1218 = vmatprep.subr.mxu0 0.0
          %1219 = vmatpush1.msra.mxu0 %v725
          %1220 = vmatprep.subr.mxu0 0.0
          %1221 = vmatpush1.msra.mxu0 %v728
          %1222 = vmatprep.mubr.f32.mxu0 %v860
          %1223 = vmatmul.mubr.f32.gmra.mrb[0].mxu0 %v858
          %v1224 = vpop.f32.mrb[0].mxu0
          %v1225 = vadd.f32 %v1155, %v1224
          %v1226 = vpop.f32.mrb[0].mxu0
          %1227 = vdwg.mxu0
          %1228 = vmatprep.subr.mxu0 0.0
          %1229 = vmatpush1.msra.mxu0 %v731
          %1230 = vmatprep.subr.mxu0 0.0
          %1231 = vmatpush1.msra.mxu0 %v734
          %1232 = vmatprep.subr.mxu0 0.0
          %1233 = vmatpush1.msra.mxu0 %v737
          %1234 = vmatprep.subr.mxu0 0.0
          %1235 = vmatpush1.msra.mxu0 %v740
          %1236 = vmatprep.subr.mxu0 0.0
          %1237 = vmatpush1.msra.mxu0 %v743
          %1238 = vmatprep.subr.mxu0 0.0
          %1239 = vmatpush1.msra.mxu0 %v746
          %1240 = vmatprep.subr.mxu0 0.0
          %1241 = vmatpush1.msra.mxu0 %v749
          %1242 = vmatprep.subr.mxu0 0.0
          %1243 = vmatpush1.msra.mxu0 %v752
          %1244 = vmatprep.subr.mxu0 0.0
          %1245 = vmatpush1.msra.mxu0 %v755
          %1246 = vmatprep.subr.mxu0 0.0
          %1247 = vmatpush1.msra.mxu0 %v758
          %1248 = vmatprep.subr.mxu0 0.0
          %1249 = vmatpush1.msra.mxu0 %v761
          %1250 = vmatprep.subr.mxu0 0.0
          %1251 = vmatpush1.msra.mxu0 %v764
          %1252 = vmatprep.subr.mxu0 0.0
          %1253 = vmatpush1.msra.mxu0 %v767
          %1254 = vmatprep.subr.mxu0 0.0
          %1255 = vmatpush1.msra.mxu0 %v770
          %1256 = vmatprep.subr.mxu0 0.0
          %1257 = vmatpush1.msra.mxu0 %v773
          %1258 = vmatprep.subr.mxu0 0.0
          %1259 = vmatpush1.msra.mxu0 %v776
          %1260 = vmatprep.subr.mxu0 0.0
          %1261 = vmatpush1.msra.mxu0 %v779
          %1262 = vmatprep.subr.mxu0 0.0
          %1263 = vmatpush1.msra.mxu0 %v782
          %1264 = vmatprep.subr.mxu0 0.0
          %1265 = vmatpush1.msra.mxu0 %v785
          %1266 = vmatprep.subr.mxu0 0.0
          %1267 = vmatpush1.msra.mxu0 %v788
          %1268 = vmatprep.subr.mxu0 0.0
          %1269 = vmatpush1.msra.mxu0 %v791
          %1270 = vmatprep.subr.mxu0 0.0
          %1271 = vmatpush1.msra.mxu0 %v794
          %1272 = vmatprep.subr.mxu0 0.0
          %1273 = vmatpush1.msra.mxu0 %v797
          %1274 = vmatprep.subr.mxu0 0.0
          %1275 = vmatpush1.msra.mxu0 %v800
          %1276 = vmatprep.subr.mxu0 0.0
          %1277 = vmatpush1.msra.mxu0 %v803
          %1278 = vmatprep.subr.mxu0 0.0
          %1279 = vmatpush1.msra.mxu0 %v806
          %1280 = vmatprep.subr.mxu0 0.0
          %1281 = vmatpush1.msra.mxu0 %v809
          %1282 = vmatprep.subr.mxu0 0.0
          %1283 = vmatpush1.msra.mxu0 %v812
          %1284 = vmatprep.subr.mxu0 0.0
          %1285 = vmatpush1.msra.mxu0 %v815
          %1286 = vmatprep.subr.mxu0 0.0
          %1287 = vmatpush1.msra.mxu0 %v818
          %1288 = vmatprep.subr.mxu0 0.0
          %1289 = vmatpush1.msra.mxu0 %v821
          %1290 = vmatprep.subr.mxu0 0.0
          %1291 = vmatpush1.msra.mxu0 %v824
          %1292 = vmatprep.mubr.f32.mxu0 %v868
          %1293 = vmatmul.mubr.f32.gmra.mrb[0].mxu0 %v867
          %v1294 = vpop.f32.mrb[0].mxu0
          %v1295 = vadd.f32 %v1225, %v1294
          %v1296 = vpop.f32.mrb[0].mxu0
          %1297 = vdwg.mxu0
          %v1298 = vmax.f32 %v1084, 0.0
          %v1299 = vmax.f32 %v1086, 0.0
          %v1300 = vmax.f32 %v1295, 0.0
          %v1301 = vld [vmem:[#allocation9] sm:$0xff]
          %v1302 = vld [vmem:[#allocation9 + $0x8] sm:$0xff]
          %v1303 = vld [vmem:[#allocation9 + $0x10] sm:$0xff]
          %v1304 = vld [vmem:[#allocation9 + $0x18] sm:$0xff]
          %v1305 = vld [vmem:[#allocation9 + $0x20] sm:$0xff]
          %v1306 = vld [vmem:[#allocation9 + $0x28] sm:$0xff]
          %v1307 = vld [vmem:[#allocation9 + $0x30] sm:$0xff]
          %v1308 = vld [vmem:[#allocation9 + $0x38] sm:$0xff]
          %v1309 = vld [vmem:[#allocation9 + $0x40] sm:$0xff]
          %v1310 = vld [vmem:[#allocation9 + $0x48] sm:$0xff]
          %v1311 = vld [vmem:[#allocation9 + $0x50] sm:$0xff]
          %v1312 = vld [vmem:[#allocation9 + $0x58] sm:$0xff]
          %v1313 = vld [vmem:[#allocation9 + $0x60] sm:$0xff]
          %v1314 = vld [vmem:[#allocation9 + $0x68] sm:$0xff]
          %v1315 = vld [vmem:[#allocation9 + $0x70] sm:$0xff]
          %v1316 = vld [vmem:[#allocation9 + $0x78] sm:$0xff]
          %v1317 = vld [vmem:[#allocation9 + $0x80] sm:$0xff]
          %v1318 = vld [vmem:[#allocation9 + $0x88] sm:$0xff]
          %v1319 = vld [vmem:[#allocation9 + $0x90] sm:$0xff]
          %v1320 = vld [vmem:[#allocation9 + $0x98] sm:$0xff]
          %v1321 = vld [vmem:[#allocation9 + $0xa0] sm:$0xff]
          %v1322 = vld [vmem:[#allocation9 + $0xa8] sm:$0xff]
          %v1323 = vld [vmem:[#allocation9 + $0xb0] sm:$0xff]
          %v1324 = vld [vmem:[#allocation9 + $0xb8] sm:$0xff]
          %v1325 = vld [vmem:[#allocation9 + $0xc0] sm:$0xff]
          %v1326 = vld [vmem:[#allocation9 + $0xc8] sm:$0xff]
          %v1327 = vld [vmem:[#allocation9 + $0xd0] sm:$0xff]
          %v1328 = vld [vmem:[#allocation9 + $0xd8] sm:$0xff]
          %v1329 = vld [vmem:[#allocation9 + $0xe0] sm:$0xff]
          %v1330 = vld [vmem:[#allocation9 + $0xe8] sm:$0xff]
          %v1331 = vld [vmem:[#allocation9 + $0xf0] sm:$0xff]
          %v1332 = vld [vmem:[#allocation9 + $0xf8] sm:$0xff]
          %v1333 = vld [vmem:[#allocation9 + $0x100] sm:$0xff]
          %v1334 = vld [vmem:[#allocation9 + $0x108] sm:$0xff]
          %v1335 = vld [vmem:[#allocation9 + $0x110] sm:$0xff]
          %v1336 = vld [vmem:[#allocation9 + $0x118] sm:$0xff]
          %v1337 = vld [vmem:[#allocation9 + $0x120] sm:$0xff]
          %v1338 = vld [vmem:[#allocation9 + $0x128] sm:$0xff]
          %v1339 = vld [vmem:[#allocation9 + $0x130] sm:$0xff]
          %v1340 = vld [vmem:[#allocation9 + $0x138] sm:$0xff]
          %v1341 = vld [vmem:[#allocation9 + $0x140] sm:$0xff]
          %v1342 = vld [vmem:[#allocation9 + $0x148] sm:$0xff]
          %v1343 = vld [vmem:[#allocation9 + $0x150] sm:$0xff]
          %v1344 = vld [vmem:[#allocation9 + $0x158] sm:$0xff]
          %v1345 = vld [vmem:[#allocation9 + $0x160] sm:$0xff]
          %v1346 = vld [vmem:[#allocation9 + $0x168] sm:$0xff]
          %v1347 = vld [vmem:[#allocation9 + $0x170] sm:$0xff]
          %v1348 = vld [vmem:[#allocation9 + $0x178] sm:$0xff]
          %v1349 = vld [vmem:[#allocation10] sm:$0x1]
          %v1351 = vlaneseq
          %v1352 = vshrl.u32 %v1351, 7
          %v1353 = vsub.s32 0, %v1352
          %v1354 = vrot.slane %v1349, %v1353
          %1356 = vmatprep.subr.mxu0 0.0
          %1357 = vmatpush1.msra.mxu0 %v1301
          %1358 = vmatprep.subr.mxu0 0.0
          %1359 = vmatpush1.msra.mxu0 %v1302
          %1360 = vmatprep.subr.mxu0 0.0
          %1361 = vmatpush1.msra.mxu0 %v1303
          %1362 = vmatprep.subr.mxu0 0.0
          %1363 = vmatpush1.msra.mxu0 %v1304
          %1364 = vmatprep.subr.mxu0 0.0
          %1365 = vmatpush1.msra.mxu0 %v1305
          %1366 = vmatprep.subr.mxu0 0.0
          %1367 = vmatpush1.msra.mxu0 %v1306
          %1368 = vmatprep.subr.mxu0 0.0
          %1369 = vmatpush1.msra.mxu0 %v1307
          %1370 = vmatprep.subr.mxu0 0.0
          %1371 = vmatpush1.msra.mxu0 %v1308
          %1372 = vmatprep.subr.mxu0 0.0
          %1373 = vmatpush1.msra.mxu0 %v1309
          %1374 = vmatprep.subr.mxu0 0.0
          %1375 = vmatpush1.msra.mxu0 %v1310
          %1376 = vmatprep.subr.mxu0 0.0
          %1377 = vmatpush1.msra.mxu0 %v1311
          %1378 = vmatprep.subr.mxu0 0.0
          %1379 = vmatpush1.msra.mxu0 %v1312
          %1380 = vmatprep.subr.mxu0 0.0
          %1381 = vmatpush1.msra.mxu0 %v1313
          %1382 = vmatprep.subr.mxu0 0.0
          %1383 = vmatpush1.msra.mxu0 %v1314
          %1384 = vmatprep.subr.mxu0 0.0
          %1385 = vmatpush1.msra.mxu0 %v1315
          %1386 = vmatprep.subr.mxu0 0.0
          %1387 = vmatpush1.msra.mxu0 %v1316
          %1388 = vmatprep.subr.mxu0 0.0
          %1389 = vmatpush1.msra.mxu0 %v1317
          %1390 = vmatprep.subr.mxu0 0.0
          %1391 = vmatpush1.msra.mxu0 %v1318
          %1392 = vmatprep.subr.mxu0 0.0
          %1393 = vmatpush1.msra.mxu0 %v1319
          %1394 = vmatprep.subr.mxu0 0.0
          %1395 = vmatpush1.msra.mxu0 %v1320
          %1396 = vmatprep.subr.mxu0 0.0
          %1397 = vmatpush1.msra.mxu0 %v1321
          %1398 = vmatprep.subr.mxu0 0.0
          %1399 = vmatpush1.msra.mxu0 %v1322
          %1400 = vmatprep.subr.mxu0 0.0
          %1401 = vmatpush1.msra.mxu0 %v1323
          %1402 = vmatprep.subr.mxu0 0.0
          %1403 = vmatpush1.msra.mxu0 %v1324
          %1404 = vmatprep.subr.mxu0 0.0
          %1405 = vmatpush1.msra.mxu0 %v1325
          %1406 = vmatprep.subr.mxu0 0.0
          %1407 = vmatpush1.msra.mxu0 %v1326
          %1408 = vmatprep.subr.mxu0 0.0
          %1409 = vmatpush1.msra.mxu0 %v1327
          %1410 = vmatprep.subr.mxu0 0.0
          %1411 = vmatpush1.msra.mxu0 %v1328
          %1412 = vmatprep.subr.mxu0 0.0
          %1413 = vmatpush1.msra.mxu0 %v1329
          %1414 = vmatprep.subr.mxu0 0.0
          %1415 = vmatpush1.msra.mxu0 %v1330
          %1416 = vmatprep.subr.mxu0 0.0
          %1417 = vmatpush1.msra.mxu0 %v1331
          %1418 = vmatprep.subr.mxu0 0.0
          %1419 = vmatpush1.msra.mxu0 %v1332
          %1420 = vmatprep.mubr.f32.mxu0 %v1299
          %1421 = vmatmul.mubr.f32.gmra.mrb[0].mxu0 %v1298
          %v1422 = vpop.f32.mrb[0].mxu0
          %v1423 = vadd.f32 %v1354, %v1422
          %v1424 = vpop.f32.mrb[0].mxu0
          %1425 = vdwg.mxu0
          %1426 = vmatprep.subr.mxu0 0.0
          %1427 = vmatpush1.msra.mxu0 %v1333
          %1428 = vmatprep.subr.mxu0 0.0
          %1429 = vmatpush1.msra.mxu0 %v1334
          %1430 = vmatprep.subr.mxu0 0.0
          %1431 = vmatpush1.msra.mxu0 %v1335
          %1432 = vmatprep.subr.mxu0 0.0
          %1433 = vmatpush1.msra.mxu0 %v1336
          %1434 = vmatprep.subr.mxu0 0.0
          %1435 = vmatpush1.msra.mxu0 %v1337
          %1436 = vmatprep.subr.mxu0 0.0
          %1437 = vmatpush1.msra.mxu0 %v1338
          %1438 = vmatprep.subr.mxu0 0.0
          %1439 = vmatpush1.msra.mxu0 %v1339
          %1440 = vmatprep.subr.mxu0 0.0
          %1441 = vmatpush1.msra.mxu0 %v1340
          %1442 = vmatprep.subr.mxu0 0.0
          %1443 = vmatpush1.msra.mxu0 %v1341
          %1444 = vmatprep.subr.mxu0 0.0
          %1445 = vmatpush1.msra.mxu0 %v1342
          %1446 = vmatprep.subr.mxu0 0.0
          %1447 = vmatpush1.msra.mxu0 %v1343
          %1448 = vmatprep.subr.mxu0 0.0
          %1449 = vmatpush1.msra.mxu0 %v1344
          %1450 = vmatprep.subr.mxu0 0.0
          %1451 = vmatpush1.msra.mxu0 %v1345
          %1452 = vmatprep.subr.mxu0 0.0
          %1453 = vmatpush1.msra.mxu0 %v1346
          %1454 = vmatprep.subr.mxu0 0.0
          %1455 = vmatpush1.msra.mxu0 %v1347
          %1456 = vmatprep.subr.mxu0 0.0
          %1457 = vmatpush1.msra.mxu0 %v1348
          %1458 = vmatprep.subr.mxu0 0.0
          %1459 = vmatpush1.msra.mxu0 0.0
          %1460 = vmatprep.subr.mxu0 0.0
          %1461 = vmatpush1.msra.mxu0 0.0
          %1462 = vmatprep.subr.mxu0 0.0
          %1463 = vmatpush1.msra.mxu0 0.0
          %1464 = vmatprep.subr.mxu0 0.0
          %1465 = vmatpush1.msra.mxu0 0.0
          %1466 = vmatprep.subr.mxu0 0.0
          %1467 = vmatpush1.msra.mxu0 0.0
          %1468 = vmatprep.subr.mxu0 0.0
          %1469 = vmatpush1.msra.mxu0 0.0
          %1470 = vmatprep.subr.mxu0 0.0
          %1471 = vmatpush1.msra.mxu0 0.0
          %1472 = vmatprep.subr.mxu0 0.0
          %1473 = vmatpush1.msra.mxu0 0.0
          %1474 = vmatprep.subr.mxu0 0.0
          %1475 = vmatpush1.msra.mxu0 0.0
          %1476 = vmatprep.subr.mxu0 0.0
          %1477 = vmatpush1.msra.mxu0 0.0
          %1478 = vmatprep.subr.mxu0 0.0
          %1479 = vmatpush1.msra.mxu0 0.0
          %1480 = vmatprep.subr.mxu0 0.0
          %1481 = vmatpush1.msra.mxu0 0.0
          %1482 = vmatprep.subr.mxu0 0.0
          %1483 = vmatpush1.msra.mxu0 0.0
          %1484 = vmatprep.subr.mxu0 0.0
          %1485 = vmatpush1.msra.mxu0 0.0
          %1486 = vmatprep.subr.mxu0 0.0
          %1487 = vmatpush1.msra.mxu0 0.0
          %1488 = vmatprep.subr.mxu0 0.0
          %1489 = vmatpush1.msra.mxu0 0.0
          %1490 = vmatprep.mubr.f32.mxu0 0.0
          %1491 = vmatmul.mubr.f32.gmra.mrb[0].mxu0 %v1300
          %v1492 = vpop.f32.mrb[0].mxu0
          %v1493 = vadd.f32 %v1423, %v1492
          %v1494 = vpop.f32.mrb[0].mxu0
          %1495 = vdwg.mxu0
          %1496 = vst [vmem:[#allocation12] sm:$0x3] %v1493
        $region87: #{tpu_custom_call.1} parent=58 // pred_fallthru
          _
        // Predicated region
        $region88: #{tpu_custom_call.1} parent=58 // pred_check
          %p1497 = pneg %p162
        $region89: #{tpu_custom_call.1} parent=58 // pred_check_branch
          %1499 = sbr.rel (%p1497) target = $region91
        $region90: #{tpu_custom_call.1} parent=58 // pred_region
          %s1501 = ssub.s32 32, 32
          %1502 = vsyncadd [#allocation6], %s1501
          %s1503 = smul.addr %s24, 32
          %s1504 = scalar_lea.hbm %s5, %s1503
          %s1506 = sshll.u32 [#allocation12], 4
          %s1507 = int_to_ptr.vmem [resolvable:$true] %s1506
          %1509 = dma.vmem_to_hbm [thread:$0]  %s1507, 32, %s1504, [#allocation6]
        $region91: #{tpu_custom_call.1} parent=58 // pred_fallthru
          _
        // Predicated region
        $region92: #{tpu_custom_call.1} parent=58 // pred_check
          %p1510 = pneg %p162
        $region93: #{tpu_custom_call.1} parent=58 // pred_check_branch
          %1512 = sbr.rel (%p1510) target = $region95
        $region94: #{tpu_custom_call.1} parent=58 // pred_region
          %1513 = dma.done [#allocation6], 32
        $region95: #{tpu_custom_call.1} parent=58 // pred_fallthru
          _
      $region59: #{tpu_custom_call.1} parent=5 // pred_fallthru
        _
      %p1514 = scmp.le.s32.totalorder 2, %s15
      // Predicated region
      $region96: #{tpu_custom_call.1} parent=5 // pred_check
        %p1515 = pneg %p1514
      $region97: #{tpu_custom_call.1} parent=5 // pred_check_branch
        %1517 = sbr.rel (%p1515) target = $region99
      $region98: #{tpu_custom_call.1} parent=5 // pred_region
        %s1518 = ssub.s32 %s15, 2
      $region99: #{tpu_custom_call.1} parent=5 // pred_fallthru
        _
    $region6: #{tpu_custom_call.1} parent=1 // loop_footer
      %s19 = sadd.s32 1, %s15
    $region7: #{tpu_custom_call.1} parent=1 // loop_footer_branch
      %14 = sbr.rel target = $region3
    $region8: #{tpu_custom_call.1} parent=1 // loop_exit
      _
    %1519 = vsyncpa [#allocation5], 1
    %s1520 = scalar_lea.sflag [#allocation5], 1
    %1521 = vsyncpa %s1520, 1
    %1522 = vsyncpa [#allocation8], 1
    %1523 = vsyncpa [#allocation11], 1
    %1524 = vsyncpa [#allocation6], 1
    %s1525 = scalar_lea.sflag [#allocation6], 1
    %1526 = vsyncpa %s1525, 1

</llo_original>
